<compile_context>
chip_gen: v6e
topology: v6e:2x2x1
jax: 0.10.0
libtpu: 0.0.40
codegen_flags: <defaults>
</compile_context>

<pallas_src>
import jax
import jax.numpy as jnp
from jax.experimental import pallas as pl
from jax.experimental.pallas import tpu as pltpu


def lstm_final_state_kernel(x_ref, wih_ref, whh_ref, b_ref, h_out_ref, c_out_ref):
    """Single-layer LSTM, whole (tiny) problem resident in VMEM.

    x_ref:   (T, B, I)      time-major input
    wih_ref: (I, 4*Hp)      input->gate weights, gates (i,f,g,o) each padded
                            to Hp lanes (zero-filled), concatenated on lanes
    whh_ref: (Hp, 4*Hp)     hidden->gate weights, padded rows/cols zero-filled
    b_ref:   (1, 4*Hp)      combined bias (b_ih + b_hh), padded lanes zero
    h_out_ref, c_out_ref: (B, Hp) final hidden / cell state (padded lanes ~0)
    """
    T, B, I = x_ref.shape
    Hp = whh_ref.shape[0]

    wih = wih_ref[...]            # (I, 4*Hp)
    whh = whh_ref[...]            # (Hp, 4*Hp)
    b = b_ref[...]                # (1, 4*Hp)

    # ---- Phase 1: input projection + bias for ALL timesteps, kept as SSA
    # values (vregs), off the serial recurrence path.
    if I == 1:
        # (T, B, 1) * (1, 4*Hp) + (1, 4*Hp) -> (T, B, 4*Hp): pure VPU broadcast.
        xp = x_ref[...] * wih + b
    else:
        # Single flattened matmul instead of T tiny pushes.
        x2 = x_ref[...].reshape(T * B, I)
        xp = (jnp.dot(x2, wih, preferred_element_type=jnp.float32)
              + b).reshape(T, B, 4 * Hp)

    # ---- Phase 2: serial recurrence. One fused (B, 4*Hp) matmul per step;
    # gate slices are lane-aligned (offsets k*Hp) -> free vreg selects.
    # Peel t = 0: h0 = c0 = 0, so no h @ Whh matmul and no f*c term.
    pre0 = xp[0]
    i0 = jax.nn.sigmoid(pre0[:, 0 * Hp:1 * Hp])
    g0 = jnp.tanh(pre0[:, 2 * Hp:3 * Hp])
    o0 = jax.nn.sigmoid(pre0[:, 3 * Hp:4 * Hp])
    c = i0 * g0
    h = o0 * jnp.tanh(c)

    for t in range(1, T):         # static unroll; T is small
        pre = xp[t] + jnp.dot(h, whh, preferred_element_type=jnp.float32)
        i_g = jax.nn.sigmoid(pre[:, 0 * Hp:1 * Hp])
        f_g = jax.nn.sigmoid(pre[:, 1 * Hp:2 * Hp])
        g_g = jnp.tanh(pre[:, 2 * Hp:3 * Hp])
        o_g = jax.nn.sigmoid(pre[:, 3 * Hp:4 * Hp])
        c = f_g * c + i_g * g_g
        h = o_g * jnp.tanh(c)

    h_out_ref[...] = h            # lane-dense (B, Hp) store
    c_out_ref[...] = c


@jax.jit
def encoder_forward(x_btd, w_ih, w_hh, b_ih, b_hh):
    """Mirrors Encoder.forward: returns (hidden, cell), each (1, B, H).

    x_btd: (B, T, I) batch_first input (PyTorch convention)
    w_ih:  (4H, I), w_hh: (4H, H), b_ih/b_hh: (4H,)  — PyTorch LSTM params
    (gates stacked along the 4H dim in i, f, g, o order).
    """
    B, T, I = x_btd.shape
    H = w_hh.shape[1]
    Hp = ((H + 127) // 128) * 128          # lane-aligned per-gate width

    x_tbi = jnp.transpose(x_btd, (1, 0, 2)).astype(jnp.float32)   # (T, B, I)

    def pack_gates(mat, pad_rows):
        # mat: (rows, 4H) with gates (i,f,g,o) along the last dim.
        # -> (rows + pad_rows, 4*Hp) with each gate padded to Hp lanes.
        parts = []
        for k in range(4):
            blk = mat[:, k * H:(k + 1) * H]
            blk = jnp.pad(blk, ((0, pad_rows), (0, Hp - H)))
            parts.append(blk)
        return jnp.concatenate(parts, axis=-1)

    wih_p = pack_gates(w_ih.astype(jnp.float32).T, 0)              # (I, 4*Hp)
    whh_p = pack_gates(w_hh.astype(jnp.float32).T, Hp - H)         # (Hp, 4*Hp)
    b_p = pack_gates((b_ih + b_hh).astype(jnp.float32).reshape(1, 4 * H), 0)

    h_p, c_p = pl.pallas_call(
        lstm_final_state_kernel,
        out_shape=(
            jax.ShapeDtypeStruct((B, Hp), jnp.float32),
            jax.ShapeDtypeStruct((B, Hp), jnp.float32),
        ),
        in_specs=[pl.BlockSpec(memory_space=pltpu.MemorySpace.VMEM)] * 4,
        out_specs=(
            pl.BlockSpec(memory_space=pltpu.MemorySpace.VMEM),
            pl.BlockSpec(memory_space=pltpu.MemorySpace.VMEM),
        ),
    )(x_tbi, wih_p, whh_p, b_p)

    # TODO(synk): if ever called with many independent sequences, concat them
    # into a large batch and add a leading parallel grid axis over batch
    # chunks (dimension_semantics=("parallel",...)) to engage v7x's 2nd core.

    h = h_p[:, :H]
    c = c_p[:, :H]
    # PyTorch returns (num_layers, batch, hidden) for hidden and cell.
    return h[None, :, :], c[None, :, :]


def encoder_forward_ref(x_btd, w_ih, w_hh, b_ih, b_hh):
    """Pure-JAX reference (lax.scan) matching PyTorch LSTM semantics."""
    B, T, I = x_btd.shape
    H = w_hh.shape[1]
    b = b_ih + b_hh

    def step(carry, x_t):
        h, c = carry
        gates = x_t @ w_ih.T + h @ w_hh.T + b          # (B, 4H)
        i_g = jax.nn.sigmoid(gates[:, 0 * H:1 * H])
        f_g = jax.nn.sigmoid(gates[:, 1 * H:2 * H])
        g_g = jnp.tanh(gates[:, 2 * H:3 * H])
        o_g = jax.nn.sigmoid(gates[:, 3 * H:4 * H])
        c_new = f_g * c + i_g * g_g
        h_new = o_g * jnp.tanh(c_new)
        return (h_new, c_new), None

    h0 = jnp.zeros((B, H), jnp.float32)
    c0 = jnp.zeros((B, H), jnp.float32)
    (h_fin, c_fin), _ = lax.scan(
        step, (h0, c0),
        jnp.transpose(x_btd, (1, 0, 2)).astype(jnp.float32))
    return h_fin[None], c_fin[None]


from jax import lax  # (used by the reference scan)


if __name__ == "__main__":
    # Module defaults: input_size=1, hidden_size=30, num_layers=1.
    B, T, I, H = 2, 8, 1, 30

    key = jax.random.PRNGKey(0)
    kx, k1, k2, k3, k4 = jax.random.split(key, 5)

    # Deterministic param init, same scheme as PyTorch LSTM: U(-1/sqrt(H), 1/sqrt(H)).
    bound = 1.0 / jnp.sqrt(jnp.float32(H))
    w_ih = jax.random.uniform(k1, (4 * H, I), jnp.float32, -bound, bound)
    w_hh = jax.random.uniform(k2, (4 * H, H), jnp.float32, -bound, bound)
    b_ih = jax.random.uniform(k3, (4 * H,), jnp.float32, -bound, bound)
    b_hh = jax.random.uniform(k4, (4 * H,), jnp.float32, -bound, bound)

    x = jax.random.normal(kx, (B, T, I), jnp.float32)

    hidden, cell = encoder_forward(x, w_ih, w_hh, b_ih, b_hh)
    jax.block_until_ready((hidden, cell))

    h_ref, c_ref = encoder_forward_ref(x, w_ih, w_hh, b_ih, b_hh)
    assert hidden.shape == (1, B, H) and cell.shape == (1, B, H)
    assert jnp.allclose(hidden, h_ref, atol=1e-5, rtol=1e-5)
    assert jnp.allclose(cell, c_ref, atol=1e-5, rtol=1e-5)

    print("KERNEL_OK")
</pallas_src>

<mosaic_0001>
module attributes {stable_mosaic.version = 11 : i64} {
  func.func @lstm_final_state_kernel(%arg0: memref<8x2x1xf32, #tpu.memory_space<vmem>>, %arg1: memref<1x512xf32, #tpu.memory_space<vmem>>, %arg2: memref<128x512xf32, #tpu.memory_space<vmem>>, %arg3: memref<1x512xf32, #tpu.memory_space<vmem>>, %arg4: memref<2x128xf32, #tpu.memory_space<vmem>>, %arg5: memref<2x128xf32, #tpu.memory_space<vmem>>) attributes {dimension_semantics = [], scalar_prefetch = 0 : i64, scratch_operands = 0 : i64, tpu.core_type = #tpu.core_type<tc>} {
    %c0 = arith.constant 0 : index
    %c0_0 = arith.constant 0 : index
    %0 = vector.load %arg1[%c0, %c0_0] : memref<1x512xf32, #tpu.memory_space<vmem>>, vector<1x512xf32>
    %c0_1 = arith.constant 0 : index
    %c0_2 = arith.constant 0 : index
    %1 = vector.load %arg2[%c0_1, %c0_2] : memref<128x512xf32, #tpu.memory_space<vmem>>, vector<128x512xf32>
    %c0_3 = arith.constant 0 : index
    %c0_4 = arith.constant 0 : index
    %2 = vector.load %arg3[%c0_3, %c0_4] : memref<1x512xf32, #tpu.memory_space<vmem>>, vector<1x512xf32>
    %c0_5 = arith.constant 0 : index
    %c0_6 = arith.constant 0 : index
    %c0_7 = arith.constant 0 : index
    %3 = vector.load %arg0[%c0_5, %c0_6, %c0_7] : memref<8x2x1xf32, #tpu.memory_space<vmem>>, vector<8x2x1xf32>
    %4 = vector.shape_cast %0 : vector<1x512xf32> to vector<1x1x512xf32>
    %5 = vector.broadcast %3 : vector<8x2x1xf32> to vector<8x2x512xf32>
    %6 = vector.broadcast %4 : vector<1x1x512xf32> to vector<8x2x512xf32>
    %7 = arith.mulf %5, %6 : vector<8x2x512xf32>
    %8 = vector.shape_cast %2 : vector<1x512xf32> to vector<1x1x512xf32>
    %9 = vector.broadcast %8 : vector<1x1x512xf32> to vector<8x2x512xf32>
    %10 = arith.addf %7, %9 : vector<8x2x512xf32>
    %11 = vector.extract_strided_slice %10 {offsets = [0, 0, 0], sizes = [1, 2, 512], strides = [1, 1, 1]} : vector<8x2x512xf32> to vector<1x2x512xf32>
    %12 = vector.shape_cast %11 : vector<1x2x512xf32> to vector<2x512xf32>
    %13 = vector.extract_strided_slice %12 {offsets = [0, 0], sizes = [2, 128], strides = [1, 1]} : vector<2x512xf32> to vector<2x128xf32>
    %14 = arith.negf %13 : vector<2x128xf32>
    %15 = math.exp %14 : vector<2x128xf32>
    %cst = arith.constant 1.000000e+00 : f32
    %16 = vector.broadcast %cst : f32 to vector<2x128xf32>
    %17 = arith.addf %16, %15 : vector<2x128xf32>
    %18 = arith.divf %16, %17 : vector<2x128xf32>
    %19 = vector.extract_strided_slice %12 {offsets = [0, 256], sizes = [2, 128], strides = [1, 1]} : vector<2x512xf32> to vector<2x128xf32>
    %20 = math.tanh %19 : vector<2x128xf32>
    %21 = vector.extract_strided_slice %12 {offsets = [0, 384], sizes = [2, 128], strides = [1, 1]} : vector<2x512xf32> to vector<2x128xf32>
    %22 = arith.negf %21 : vector<2x128xf32>
    %23 = math.exp %22 : vector<2x128xf32>
    %cst_8 = arith.constant 1.000000e+00 : f32
    %24 = vector.broadcast %cst_8 : f32 to vector<2x128xf32>
    %25 = arith.addf %24, %23 : vector<2x128xf32>
    %26 = arith.divf %24, %25 : vector<2x128xf32>
    %27 = arith.mulf %18, %20 : vector<2x128xf32>
    %28 = math.tanh %27 : vector<2x128xf32>
    %29 = arith.mulf %26, %28 : vector<2x128xf32>
    %30 = vector.extract_strided_slice %10 {offsets = [1, 0, 0], sizes = [1, 2, 512], strides = [1, 1, 1]} : vector<8x2x512xf32> to vector<1x2x512xf32>
    %31 = vector.shape_cast %30 : vector<1x2x512xf32> to vector<2x512xf32>
    %cst_9 = arith.constant dense<0.000000e+00> : vector<2x512xf32>
    %32 = tpu.matmul %29, %1, %cst_9 {dimension_numbers = #tpu.dot_dimension_numbers<[1], [0], [0], [1], [0, 0, 1, 1], [], []>} : vector<2x128xf32>, vector<128x512xf32>, vector<2x512xf32> -> vector<2x512xf32>
    %33 = arith.addf %31, %32 : vector<2x512xf32>
    %34 = vector.extract_strided_slice %33 {offsets = [0, 0], sizes = [2, 128], strides = [1, 1]} : vector<2x512xf32> to vector<2x128xf32>
    %35 = arith.negf %34 : vector<2x128xf32>
    %36 = math.exp %35 : vector<2x128xf32>
    %cst_10 = arith.constant 1.000000e+00 : f32
    %37 = vector.broadcast %cst_10 : f32 to vector<2x128xf32>
    %38 = arith.addf %37, %36 : vector<2x128xf32>
    %39 = arith.divf %37, %38 : vector<2x128xf32>
    %40 = vector.extract_strided_slice %33 {offsets = [0, 128], sizes = [2, 128], strides = [1, 1]} : vector<2x512xf32> to vector<2x128xf32>
    %41 = arith.negf %40 : vector<2x128xf32>
    %42 = math.exp %41 : vector<2x128xf32>
    %cst_11 = arith.constant 1.000000e+00 : f32
    %43 = vector.broadcast %cst_11 : f32 to vector<2x128xf32>
    %44 = arith.addf %43, %42 : vector<2x128xf32>
    %45 = arith.divf %43, %44 : vector<2x128xf32>
    %46 = vector.extract_strided_slice %33 {offsets = [0, 256], sizes = [2, 128], strides = [1, 1]} : vector<2x512xf32> to vector<2x128xf32>
    %47 = math.tanh %46 : vector<2x128xf32>
    %48 = vector.extract_strided_slice %33 {offsets = [0, 384], sizes = [2, 128], strides = [1, 1]} : vector<2x512xf32> to vector<2x128xf32>
    %49 = arith.negf %48 : vector<2x128xf32>
    %50 = math.exp %49 : vector<2x128xf32>
    %cst_12 = arith.constant 1.000000e+00 : f32
    %51 = vector.broadcast %cst_12 : f32 to vector<2x128xf32>
    %52 = arith.addf %51, %50 : vector<2x128xf32>
    %53 = arith.divf %51, %52 : vector<2x128xf32>
    %54 = arith.mulf %45, %27 : vector<2x128xf32>
    %55 = arith.mulf %39, %47 : vector<2x128xf32>
    %56 = arith.addf %54, %55 : vector<2x128xf32>
    %57 = math.tanh %56 : vector<2x128xf32>
    %58 = arith.mulf %53, %57 : vector<2x128xf32>
    %59 = vector.extract_strided_slice %10 {offsets = [2, 0, 0], sizes = [1, 2, 512], strides = [1, 1, 1]} : vector<8x2x512xf32> to vector<1x2x512xf32>
    %60 = vector.shape_cast %59 : vector<1x2x512xf32> to vector<2x512xf32>
    %cst_13 = arith.constant dense<0.000000e+00> : vector<2x512xf32>
    %61 = tpu.matmul %58, %1, %cst_13 {dimension_numbers = #tpu.dot_dimension_numbers<[1], [0], [0], [1], [0, 0, 1, 1], [], []>} : vector<2x128xf32>, vector<128x512xf32>, vector<2x512xf32> -> vector<2x512xf32>
    %62 = arith.addf %60, %61 : vector<2x512xf32>
    %63 = vector.extract_strided_slice %62 {offsets = [0, 0], sizes = [2, 128], strides = [1, 1]} : vector<2x512xf32> to vector<2x128xf32>
    %64 = arith.negf %63 : vector<2x128xf32>
    %65 = math.exp %64 : vector<2x128xf32>
    %cst_14 = arith.constant 1.000000e+00 : f32
    %66 = vector.broadcast %cst_14 : f32 to vector<2x128xf32>
    %67 = arith.addf %66, %65 : vector<2x128xf32>
    %68 = arith.divf %66, %67 : vector<2x128xf32>
    %69 = vector.extract_strided_slice %62 {offsets = [0, 128], sizes = [2, 128], strides = [1, 1]} : vector<2x512xf32> to vector<2x128xf32>
    %70 = arith.negf %69 : vector<2x128xf32>
    %71 = math.exp %70 : vector<2x128xf32>
    %cst_15 = arith.constant 1.000000e+00 : f32
    %72 = vector.broadcast %cst_15 : f32 to vector<2x128xf32>
    %73 = arith.addf %72, %71 : vector<2x128xf32>
    %74 = arith.divf %72, %73 : vector<2x128xf32>
    %75 = vector.extract_strided_slice %62 {offsets = [0, 256], sizes = [2, 128], strides = [1, 1]} : vector<2x512xf32> to vector<2x128xf32>
    %76 = math.tanh %75 : vector<2x128xf32>
    %77 = vector.extract_strided_slice %62 {offsets = [0, 384], sizes = [2, 128], strides = [1, 1]} : vector<2x512xf32> to vector<2x128xf32>
    %78 = arith.negf %77 : vector<2x128xf32>
    %79 = math.exp %78 : vector<2x128xf32>
    %cst_16 = arith.constant 1.000000e+00 : f32
    %80 = vector.broadcast %cst_16 : f32 to vector<2x128xf32>
    %81 = arith.addf %80, %79 : vector<2x128xf32>
    %82 = arith.divf %80, %81 : vector<2x128xf32>
    %83 = arith.mulf %74, %56 : vector<2x128xf32>
    %84 = arith.mulf %68, %76 : vector<2x128xf32>
    %85 = arith.addf %83, %84 : vector<2x128xf32>
    %86 = math.tanh %85 : vector<2x128xf32>
    %87 = arith.mulf %82, %86 : vector<2x128xf32>
    %88 = vector.extract_strided_slice %10 {offsets = [3, 0, 0], sizes = [1, 2, 512], strides = [1, 1, 1]} : vector<8x2x512xf32> to vector<1x2x512xf32>
    %89 = vector.shape_cast %88 : vector<1x2x512xf32> to vector<2x512xf32>
    %cst_17 = arith.constant dense<0.000000e+00> : vector<2x512xf32>
    %90 = tpu.matmul %87, %1, %cst_17 {dimension_numbers = #tpu.dot_dimension_numbers<[1], [0], [0], [1], [0, 0, 1, 1], [], []>} : vector<2x128xf32>, vector<128x512xf32>, vector<2x512xf32> -> vector<2x512xf32>
    %91 = arith.addf %89, %90 : vector<2x512xf32>
    %92 = vector.extract_strided_slice %91 {offsets = [0, 0], sizes = [2, 128], strides = [1, 1]} : vector<2x512xf32> to vector<2x128xf32>
    %93 = arith.negf %92 : vector<2x128xf32>
    %94 = math.exp %93 : vector<2x128xf32>
    %cst_18 = arith.constant 1.000000e+00 : f32
    %95 = vector.broadcast %cst_18 : f32 to vector<2x128xf32>
    %96 = arith.addf %95, %94 : vector<2x128xf32>
    %97 = arith.divf %95, %96 : vector<2x128xf32>
    %98 = vector.extract_strided_slice %91 {offsets = [0, 128], sizes = [2, 128], strides = [1, 1]} : vector<2x512xf32> to vector<2x128xf32>
    %99 = arith.negf %98 : vector<2x128xf32>
    %100 = math.exp %99 : vector<2x128xf32>
    %cst_19 = arith.constant 1.000000e+00 : f32
    %101 = vector.broadcast %cst_19 : f32 to vector<2x128xf32>
    %102 = arith.addf %101, %100 : vector<2x128xf32>
    %103 = arith.divf %101, %102 : vector<2x128xf32>
    %104 = vector.extract_strided_slice %91 {offsets = [0, 256], sizes = [2, 128], strides = [1, 1]} : vector<2x512xf32> to vector<2x128xf32>
    %105 = math.tanh %104 : vector<2x128xf32>
    %106 = vector.extract_strided_slice %91 {offsets = [0, 384], sizes = [2, 128], strides = [1, 1]} : vector<2x512xf32> to vector<2x128xf32>
    %107 = arith.negf %106 : vector<2x128xf32>
    %108 = math.exp %107 : vector<2x128xf32>
    %cst_20 = arith.constant 1.000000e+00 : f32
    %109 = vector.broadcast %cst_20 : f32 to vector<2x128xf32>
    %110 = arith.addf %109, %108 : vector<2x128xf32>
    %111 = arith.divf %109, %110 : vector<2x128xf32>
    %112 = arith.mulf %103, %85 : vector<2x128xf32>
    %113 = arith.mulf %97, %105 : vector<2x128xf32>
    %114 = arith.addf %112, %113 : vector<2x128xf32>
    %115 = math.tanh %114 : vector<2x128xf32>
    %116 = arith.mulf %111, %115 : vector<2x128xf32>
    %117 = vector.extract_strided_slice %10 {offsets = [4, 0, 0], sizes = [1, 2, 512], strides = [1, 1, 1]} : vector<8x2x512xf32> to vector<1x2x512xf32>
    %118 = vector.shape_cast %117 : vector<1x2x512xf32> to vector<2x512xf32>
    %cst_21 = arith.constant dense<0.000000e+00> : vector<2x512xf32>
    %119 = tpu.matmul %116, %1, %cst_21 {dimension_numbers = #tpu.dot_dimension_numbers<[1], [0], [0], [1], [0, 0, 1, 1], [], []>} : vector<2x128xf32>, vector<128x512xf32>, vector<2x512xf32> -> vector<2x512xf32>
    %120 = arith.addf %118, %119 : vector<2x512xf32>
    %121 = vector.extract_strided_slice %120 {offsets = [0, 0], sizes = [2, 128], strides = [1, 1]} : vector<2x512xf32> to vector<2x128xf32>
    %122 = arith.negf %121 : vector<2x128xf32>
    %123 = math.exp %122 : vector<2x128xf32>
    %cst_22 = arith.constant 1.000000e+00 : f32
    %124 = vector.broadcast %cst_22 : f32 to vector<2x128xf32>
    %125 = arith.addf %124, %123 : vector<2x128xf32>
    %126 = arith.divf %124, %125 : vector<2x128xf32>
    %127 = vector.extract_strided_slice %120 {offsets = [0, 128], sizes = [2, 128], strides = [1, 1]} : vector<2x512xf32> to vector<2x128xf32>
    %128 = arith.negf %127 : vector<2x128xf32>
    %129 = math.exp %128 : vector<2x128xf32>
    %cst_23 = arith.constant 1.000000e+00 : f32
    %130 = vector.broadcast %cst_23 : f32 to vector<2x128xf32>
    %131 = arith.addf %130, %129 : vector<2x128xf32>
    %132 = arith.divf %130, %131 : vector<2x128xf32>
    %133 = vector.extract_strided_slice %120 {offsets = [0, 256], sizes = [2, 128], strides = [1, 1]} : vector<2x512xf32> to vector<2x128xf32>
    %134 = math.tanh %133 : vector<2x128xf32>
    %135 = vector.extract_strided_slice %120 {offsets = [0, 384], sizes = [2, 128], strides = [1, 1]} : vector<2x512xf32> to vector<2x128xf32>
    %136 = arith.negf %135 : vector<2x128xf32>
    %137 = math.exp %136 : vector<2x128xf32>
    %cst_24 = arith.constant 1.000000e+00 : f32
    %138 = vector.broadcast %cst_24 : f32 to vector<2x128xf32>
    %139 = arith.addf %138, %137 : vector<2x128xf32>
    %140 = arith.divf %138, %139 : vector<2x128xf32>
    %141 = arith.mulf %132, %114 : vector<2x128xf32>
    %142 = arith.mulf %126, %134 : vector<2x128xf32>
    %143 = arith.addf %141, %142 : vector<2x128xf32>
    %144 = math.tanh %143 : vector<2x128xf32>
    %145 = arith.mulf %140, %144 : vector<2x128xf32>
    %146 = vector.extract_strided_slice %10 {offsets = [5, 0, 0], sizes = [1, 2, 512], strides = [1, 1, 1]} : vector<8x2x512xf32> to vector<1x2x512xf32>
    %147 = vector.shape_cast %146 : vector<1x2x512xf32> to vector<2x512xf32>
    %cst_25 = arith.constant dense<0.000000e+00> : vector<2x512xf32>
    %148 = tpu.matmul %145, %1, %cst_25 {dimension_numbers = #tpu.dot_dimension_numbers<[1], [0], [0], [1], [0, 0, 1, 1], [], []>} : vector<2x128xf32>, vector<128x512xf32>, vector<2x512xf32> -> vector<2x512xf32>
    %149 = arith.addf %147, %148 : vector<2x512xf32>
    %150 = vector.extract_strided_slice %149 {offsets = [0, 0], sizes = [2, 128], strides = [1, 1]} : vector<2x512xf32> to vector<2x128xf32>
    %151 = arith.negf %150 : vector<2x128xf32>
    %152 = math.exp %151 : vector<2x128xf32>
    %cst_26 = arith.constant 1.000000e+00 : f32
    %153 = vector.broadcast %cst_26 : f32 to vector<2x128xf32>
    %154 = arith.addf %153, %152 : vector<2x128xf32>
    %155 = arith.divf %153, %154 : vector<2x128xf32>
    %156 = vector.extract_strided_slice %149 {offsets = [0, 128], sizes = [2, 128], strides = [1, 1]} : vector<2x512xf32> to vector<2x128xf32>
    %157 = arith.negf %156 : vector<2x128xf32>
    %158 = math.exp %157 : vector<2x128xf32>
    %cst_27 = arith.constant 1.000000e+00 : f32
    %159 = vector.broadcast %cst_27 : f32 to vector<2x128xf32>
    %160 = arith.addf %159, %158 : vector<2x128xf32>
    %161 = arith.divf %159, %160 : vector<2x128xf32>
    %162 = vector.extract_strided_slice %149 {offsets = [0, 256], sizes = [2, 128], strides = [1, 1]} : vector<2x512xf32> to vector<2x128xf32>
    %163 = math.tanh %162 : vector<2x128xf32>
    %164 = vector.extract_strided_slice %149 {offsets = [0, 384], sizes = [2, 128], strides = [1, 1]} : vector<2x512xf32> to vector<2x128xf32>
    %165 = arith.negf %164 : vector<2x128xf32>
    %166 = math.exp %165 : vector<2x128xf32>
    %cst_28 = arith.constant 1.000000e+00 : f32
    %167 = vector.broadcast %cst_28 : f32 to vector<2x128xf32>
    %168 = arith.addf %167, %166 : vector<2x128xf32>
    %169 = arith.divf %167, %168 : vector<2x128xf32>
    %170 = arith.mulf %161, %143 : vector<2x128xf32>
    %171 = arith.mulf %155, %163 : vector<2x128xf32>
    %172 = arith.addf %170, %171 : vector<2x128xf32>
    %173 = math.tanh %172 : vector<2x128xf32>
    %174 = arith.mulf %169, %173 : vector<2x128xf32>
    %175 = vector.extract_strided_slice %10 {offsets = [6, 0, 0], sizes = [1, 2, 512], strides = [1, 1, 1]} : vector<8x2x512xf32> to vector<1x2x512xf32>
    %176 = vector.shape_cast %175 : vector<1x2x512xf32> to vector<2x512xf32>
    %cst_29 = arith.constant dense<0.000000e+00> : vector<2x512xf32>
    %177 = tpu.matmul %174, %1, %cst_29 {dimension_numbers = #tpu.dot_dimension_numbers<[1], [0], [0], [1], [0, 0, 1, 1], [], []>} : vector<2x128xf32>, vector<128x512xf32>, vector<2x512xf32> -> vector<2x512xf32>
    %178 = arith.addf %176, %177 : vector<2x512xf32>
    %179 = vector.extract_strided_slice %178 {offsets = [0, 0], sizes = [2, 128], strides = [1, 1]} : vector<2x512xf32> to vector<2x128xf32>
    %180 = arith.negf %179 : vector<2x128xf32>
    %181 = math.exp %180 : vector<2x128xf32>
    %cst_30 = arith.constant 1.000000e+00 : f32
    %182 = vector.broadcast %cst_30 : f32 to vector<2x128xf32>
    %183 = arith.addf %182, %181 : vector<2x128xf32>
    %184 = arith.divf %182, %183 : vector<2x128xf32>
    %185 = vector.extract_strided_slice %178 {offsets = [0, 128], sizes = [2, 128], strides = [1, 1]} : vector<2x512xf32> to vector<2x128xf32>
    %186 = arith.negf %185 : vector<2x128xf32>
    %187 = math.exp %186 : vector<2x128xf32>
    %cst_31 = arith.constant 1.000000e+00 : f32
    %188 = vector.broadcast %cst_31 : f32 to vector<2x128xf32>
    %189 = arith.addf %188, %187 : vector<2x128xf32>
    %190 = arith.divf %188, %189 : vector<2x128xf32>
    %191 = vector.extract_strided_slice %178 {offsets = [0, 256], sizes = [2, 128], strides = [1, 1]} : vector<2x512xf32> to vector<2x128xf32>
    %192 = math.tanh %191 : vector<2x128xf32>
    %193 = vector.extract_strided_slice %178 {offsets = [0, 384], sizes = [2, 128], strides = [1, 1]} : vector<2x512xf32> to vector<2x128xf32>
    %194 = arith.negf %193 : vector<2x128xf32>
    %195 = math.exp %194 : vector<2x128xf32>
    %cst_32 = arith.constant 1.000000e+00 : f32
    %196 = vector.broadcast %cst_32 : f32 to vector<2x128xf32>
    %197 = arith.addf %196, %195 : vector<2x128xf32>
    %198 = arith.divf %196, %197 : vector<2x128xf32>
    %199 = arith.mulf %190, %172 : vector<2x128xf32>
    %200 = arith.mulf %184, %192 : vector<2x128xf32>
    %201 = arith.addf %199, %200 : vector<2x128xf32>
    %202 = math.tanh %201 : vector<2x128xf32>
    %203 = arith.mulf %198, %202 : vector<2x128xf32>
    %204 = vector.extract_strided_slice %10 {offsets = [7, 0, 0], sizes = [1, 2, 512], strides = [1, 1, 1]} : vector<8x2x512xf32> to vector<1x2x512xf32>
    %205 = vector.shape_cast %204 : vector<1x2x512xf32> to vector<2x512xf32>
    %cst_33 = arith.constant dense<0.000000e+00> : vector<2x512xf32>
    %206 = tpu.matmul %203, %1, %cst_33 {dimension_numbers = #tpu.dot_dimension_numbers<[1], [0], [0], [1], [0, 0, 1, 1], [], []>} : vector<2x128xf32>, vector<128x512xf32>, vector<2x512xf32> -> vector<2x512xf32>
    %207 = arith.addf %205, %206 : vector<2x512xf32>
    %208 = vector.extract_strided_slice %207 {offsets = [0, 0], sizes = [2, 128], strides = [1, 1]} : vector<2x512xf32> to vector<2x128xf32>
    %209 = arith.negf %208 : vector<2x128xf32>
    %210 = math.exp %209 : vector<2x128xf32>
    %cst_34 = arith.constant 1.000000e+00 : f32
    %211 = vector.broadcast %cst_34 : f32 to vector<2x128xf32>
    %212 = arith.addf %211, %210 : vector<2x128xf32>
    %213 = arith.divf %211, %212 : vector<2x128xf32>
    %214 = vector.extract_strided_slice %207 {offsets = [0, 128], sizes = [2, 128], strides = [1, 1]} : vector<2x512xf32> to vector<2x128xf32>
    %215 = arith.negf %214 : vector<2x128xf32>
    %216 = math.exp %215 : vector<2x128xf32>
    %cst_35 = arith.constant 1.000000e+00 : f32
    %217 = vector.broadcast %cst_35 : f32 to vector<2x128xf32>
    %218 = arith.addf %217, %216 : vector<2x128xf32>
    %219 = arith.divf %217, %218 : vector<2x128xf32>
    %220 = vector.extract_strided_slice %207 {offsets = [0, 256], sizes = [2, 128], strides = [1, 1]} : vector<2x512xf32> to vector<2x128xf32>
    %221 = math.tanh %220 : vector<2x128xf32>
    %222 = vector.extract_strided_slice %207 {offsets = [0, 384], sizes = [2, 128], strides = [1, 1]} : vector<2x512xf32> to vector<2x128xf32>
    %223 = arith.negf %222 : vector<2x128xf32>
    %224 = math.exp %223 : vector<2x128xf32>
    %cst_36 = arith.constant 1.000000e+00 : f32
    %225 = vector.broadcast %cst_36 : f32 to vector<2x128xf32>
    %226 = arith.addf %225, %224 : vector<2x128xf32>
    %227 = arith.divf %225, %226 : vector<2x128xf32>
    %228 = arith.mulf %219, %201 : vector<2x128xf32>
    %229 = arith.mulf %213, %221 : vector<2x128xf32>
    %230 = arith.addf %228, %229 : vector<2x128xf32>
    %231 = math.tanh %230 : vector<2x128xf32>
    %232 = arith.mulf %227, %231 : vector<2x128xf32>
    %c0_37 = arith.constant 0 : index
    %c0_38 = arith.constant 0 : index
    %233 = vector.load %arg4[%c0_37, %c0_38] : memref<2x128xf32, #tpu.memory_space<vmem>>, vector<2x128xf32>
    tpu.vector_store %arg4[%c0_37, %c0_38], %232 {strides = array<i32>} : memref<2x128xf32, #tpu.memory_space<vmem>>, vector<2x128xf32>,
    %c0_39 = arith.constant 0 : index
    %c0_40 = arith.constant 0 : index
    %234 = vector.load %arg5[%c0_39, %c0_40] : memref<2x128xf32, #tpu.memory_space<vmem>>, vector<2x128xf32>
    tpu.vector_store %arg5[%c0_39, %c0_40], %230 {strides = array<i32>} : memref<2x128xf32, #tpu.memory_space<vmem>>, vector<2x128xf32>,
    return
  }
}

</mosaic_0001>

<llo_original>
// kernel: encoder_forward.1
$region0: #{encoder_forward.1}
  #allocation0 [shape = 'u32[]', space=smem, size = 0x4, offset = 0x4, fixed_abs, tag = 'smem constant byte address 0x4 - core index']
  #allocation1 [shape = 'u32[144,128]{1,0:T(1,128)}', space=vmem, size = 0x12000, scoped, tag = 'internal scratch']
  %s0 = inlined_call_operand.vmem [shape: f32[8,2,1], index: 0, kind: input, shape index: {}]
  %s1 = inlined_call_operand.vmem [shape: f32[1,512], index: 1, kind: input, shape index: {}]
  %s2 = inlined_call_operand.vmem [shape: f32[128,512], index: 2, kind: input, shape index: {}]
  %s3 = inlined_call_operand.vmem [shape: f32[1,512], index: 3, kind: input, shape index: {}]
  %s4 = inlined_call_operand.vmem [shape: f32[2,128], index: 4, kind: output, shape index: {0}]
  %s5 = inlined_call_operand.vmem [shape: f32[2,128], index: 5, kind: output, shape index: {1}]
  %6 = xla_tuple %s4, %s5
  %s7 = sld [smem:[#allocation0]]
  $region34: #{encoder_forward.1} parent=0
    _
  %s9 = ssub.s32 1, %s7
  %s10 = scalar_select 0, %s9, %s7
  // Predicated region
  $region2: #{encoder_forward.1} parent=0 // pred_check
    _
  $region3: #{encoder_forward.1} parent=0 // pred_check_branch
    %12 = sbr.rel (0) target = $region5
  $region4: #{encoder_forward.1} parent=0 // pred_region
    _
  $region5: #{encoder_forward.1} parent=0 // pred_fallthru
    _
  // Predicated region
  $region6: #{encoder_forward.1} parent=0 // pred_check
    _
  $region7: #{encoder_forward.1} parent=0 // pred_check_branch
    %14 = sbr.rel (0) target = $region9
  $region8: #{encoder_forward.1} parent=0 // pred_region
    _
  $region9: #{encoder_forward.1} parent=0 // pred_fallthru
    _
  // Predicated region
  $region10: #{encoder_forward.1} parent=0 // pred_check
    _
  $region11: #{encoder_forward.1} parent=0 // pred_check_branch
    %16 = sbr.rel (0) target = $region13
  $region12: #{encoder_forward.1} parent=0 // pred_region
    _
  $region13: #{encoder_forward.1} parent=0 // pred_fallthru
    _
  // Predicated region
  $region14: #{encoder_forward.1} parent=0 // pred_check
    _
  $region15: #{encoder_forward.1} parent=0 // pred_check_branch
    %18 = sbr.rel (0) target = $region17
  $region16: #{encoder_forward.1} parent=0 // pred_region
    _
  $region17: #{encoder_forward.1} parent=0 // pred_fallthru
    _
  %v19 = vld [vmem:[%s1] sm:$0xf]
  %v20 = vld [vmem:[%s2] sm:$0xff]
  %v21 = vld [vmem:[%s2 + $0x8] sm:$0xff]
  %v22 = vld [vmem:[%s2 + $0x10] sm:$0xff]
  %v23 = vld [vmem:[%s2 + $0x18] sm:$0xff]
  %v24 = vld [vmem:[%s2 + $0x20] sm:$0xff]
  %v25 = vld [vmem:[%s2 + $0x28] sm:$0xff]
  %v26 = vld [vmem:[%s2 + $0x30] sm:$0xff]
  %v27 = vld [vmem:[%s2 + $0x38] sm:$0xff]
  %v28 = vld [vmem:[%s2 + $0x40] sm:$0xff]
  %v29 = vld [vmem:[%s2 + $0x48] sm:$0xff]
  %v30 = vld [vmem:[%s2 + $0x50] sm:$0xff]
  %v31 = vld [vmem:[%s2 + $0x58] sm:$0xff]
  %v32 = vld [vmem:[%s2 + $0x60] sm:$0xff]
  %v33 = vld [vmem:[%s2 + $0x68] sm:$0xff]
  %v34 = vld [vmem:[%s2 + $0x70] sm:$0xff]
  %v35 = vld [vmem:[%s2 + $0x78] sm:$0xff]
  %v36 = vld [vmem:[%s2 + $0x80] sm:$0xff]
  %v37 = vld [vmem:[%s2 + $0x88] sm:$0xff]
  %v38 = vld [vmem:[%s2 + $0x90] sm:$0xff]
  %v39 = vld [vmem:[%s2 + $0x98] sm:$0xff]
  %v40 = vld [vmem:[%s2 + $0xa0] sm:$0xff]
  %v41 = vld [vmem:[%s2 + $0xa8] sm:$0xff]
  %v42 = vld [vmem:[%s2 + $0xb0] sm:$0xff]
  %v43 = vld [vmem:[%s2 + $0xb8] sm:$0xff]
  %v44 = vld [vmem:[%s2 + $0xc0] sm:$0xff]
  %v45 = vld [vmem:[%s2 + $0xc8] sm:$0xff]
  %v46 = vld [vmem:[%s2 + $0xd0] sm:$0xff]
  %v47 = vld [vmem:[%s2 + $0xd8] sm:$0xff]
  %v48 = vld [vmem:[%s2 + $0xe0] sm:$0xff]
  %v49 = vld [vmem:[%s2 + $0xe8] sm:$0xff]
  %v50 = vld [vmem:[%s2 + $0xf0] sm:$0xff]
  %v51 = vld [vmem:[%s2 + $0xf8] sm:$0xff]
  %v52 = vld [vmem:[%s2 + $0x100] sm:$0xff]
  %v53 = vld [vmem:[%s2 + $0x108] sm:$0xff]
  %v54 = vld [vmem:[%s2 + $0x110] sm:$0xff]
  %v55 = vld [vmem:[%s2 + $0x118] sm:$0xff]
  %v56 = vld [vmem:[%s2 + $0x120] sm:$0xff]
  %v57 = vld [vmem:[%s2 + $0x128] sm:$0xff]
  %v58 = vld [vmem:[%s2 + $0x130] sm:$0xff]
  %v59 = vld [vmem:[%s2 + $0x138] sm:$0xff]
  %v60 = vld [vmem:[%s2 + $0x140] sm:$0xff]
  %v61 = vld [vmem:[%s2 + $0x148] sm:$0xff]
  %v62 = vld [vmem:[%s2 + $0x150] sm:$0xff]
  %v63 = vld [vmem:[%s2 + $0x158] sm:$0xff]
  %v64 = vld [vmem:[%s2 + $0x160] sm:$0xff]
  %v65 = vld [vmem:[%s2 + $0x168] sm:$0xff]
  %v66 = vld [vmem:[%s2 + $0x170] sm:$0xff]
  %v67 = vld [vmem:[%s2 + $0x178] sm:$0xff]
  %v68 = vld [vmem:[%s2 + $0x180] sm:$0xff]
  %v69 = vld [vmem:[%s2 + $0x188] sm:$0xff]
  %v70 = vld [vmem:[%s2 + $0x190] sm:$0xff]
  %v71 = vld [vmem:[%s2 + $0x198] sm:$0xff]
  %v72 = vld [vmem:[%s2 + $0x1a0] sm:$0xff]
  %v73 = vld [vmem:[%s2 + $0x1a8] sm:$0xff]
  %v74 = vld [vmem:[%s2 + $0x1b0] sm:$0xff]
  %v75 = vld [vmem:[%s2 + $0x1b8] sm:$0xff]
  %v76 = vld [vmem:[%s2 + $0x1c0] sm:$0xff]
  %v77 = vld [vmem:[%s2 + $0x1c8] sm:$0xff]
  %v78 = vld [vmem:[%s2 + $0x1d0] sm:$0xff]
  %v79 = vld [vmem:[%s2 + $0x1d8] sm:$0xff]
  %v80 = vld [vmem:[%s2 + $0x1e0] sm:$0xff]
  %v81 = vld [vmem:[%s2 + $0x1e8] sm:$0xff]
  %v82 = vld [vmem:[%s2 + $0x1f0] sm:$0xff]
  %v83 = vld [vmem:[%s2 + $0x1f8] sm:$0xff]
  %v84 = vld [vmem:[%s3] sm:$0xf]
  %v85 = vld [vmem:[%s0] sm:$0x3]
  %v86 = vld [vmem:[%s0 + $0x2] sm:$0x3]
  %v87 = vld [vmem:[%s0 + $0x4] sm:$0x3]
  %v88 = vld [vmem:[%s0 + $0x6] sm:$0x3]
  %v89 = vld [vmem:[%s0 + $0x8] sm:$0x3]
  %v90 = vld [vmem:[%s0 + $0xa] sm:$0x3]
  %v91 = vld [vmem:[%s0 + $0xc] sm:$0x3]
  %v92 = vld [vmem:[%s0 + $0xe] sm:$0x3]
  %94 = vset.pattern.permute.xlu0 0
  %95 = vperm.xlu0 %94, %v85
  %v96 = vpop.permute.xlu0 %95
  %99 = vset.pattern.permute.xlu0 0
  %100 = vperm.xlu0 %99, %v86
  %v101 = vpop.permute.xlu0 %100
  %104 = vset.pattern.permute.xlu0 0
  %105 = vperm.xlu0 %104, %v87
  %v106 = vpop.permute.xlu0 %105
  %109 = vset.pattern.permute.xlu0 0
  %110 = vperm.xlu0 %109, %v88
  %v111 = vpop.permute.xlu0 %110
  %114 = vset.pattern.permute.xlu0 0
  %115 = vperm.xlu0 %114, %v89
  %v116 = vpop.permute.xlu0 %115
  %119 = vset.pattern.permute.xlu0 0
  %120 = vperm.xlu0 %119, %v90
  %v121 = vpop.permute.xlu0 %120
  %124 = vset.pattern.permute.xlu0 0
  %125 = vperm.xlu0 %124, %v91
  %v126 = vpop.permute.xlu0 %125
  %129 = vset.pattern.permute.xlu0 0
  %130 = vperm.xlu0 %129, %v92
  %v131 = vpop.permute.xlu0 %130
  %v134 = vlaneseq
  %v135 = vshrl.u32 %v134, 7
  %v136 = vsub.s32 0, %v135
  %v137 = vrot.slane %v19, %v136
  %v138 = vlaneseq
  %v139 = vshrl.u32 %v138, 7
  %v140 = vsub.s32 1, %v139
  %v141 = vrot.slane %v19, %v140
  %v142 = vlaneseq
  %v143 = vshrl.u32 %v142, 7
  %v144 = vsub.s32 2, %v143
  %v145 = vrot.slane %v19, %v144
  %v146 = vlaneseq
  %v147 = vshrl.u32 %v146, 7
  %v148 = vsub.s32 3, %v147
  %v149 = vrot.slane %v19, %v148
  %v154 = vmul.f32 %v96, %v137
  %v155 = vmul.f32 %v96, %v145
  %v156 = vmul.f32 %v96, %v149
  %v157 = vmul.f32 %v101, %v137
  %v158 = vmul.f32 %v101, %v141
  %v159 = vmul.f32 %v101, %v145
  %v160 = vmul.f32 %v101, %v149
  %v161 = vmul.f32 %v106, %v137
  %v162 = vmul.f32 %v106, %v141
  %v163 = vmul.f32 %v106, %v145
  %v164 = vmul.f32 %v106, %v149
  %v165 = vmul.f32 %v111, %v137
  %v166 = vmul.f32 %v111, %v141
  %v167 = vmul.f32 %v111, %v145
  %v168 = vmul.f32 %v111, %v149
  %v169 = vmul.f32 %v116, %v137
  %v170 = vmul.f32 %v116, %v141
  %v171 = vmul.f32 %v116, %v145
  %v172 = vmul.f32 %v116, %v149
  %v173 = vmul.f32 %v121, %v137
  %v174 = vmul.f32 %v121, %v141
  %v175 = vmul.f32 %v121, %v145
  %v176 = vmul.f32 %v121, %v149
  %v177 = vmul.f32 %v126, %v137
  %v178 = vmul.f32 %v126, %v141
  %v179 = vmul.f32 %v126, %v145
  %v180 = vmul.f32 %v126, %v149
  %v181 = vmul.f32 %v131, %v137
  %v182 = vmul.f32 %v131, %v141
  %v183 = vmul.f32 %v131, %v145
  %v184 = vmul.f32 %v131, %v149
  %v186 = vlaneseq
  %v187 = vshrl.u32 %v186, 7
  %v188 = vsub.s32 0, %v187
  %v189 = vrot.slane %v84, %v188
  %v190 = vlaneseq
  %v191 = vshrl.u32 %v190, 7
  %v192 = vsub.s32 1, %v191
  %v193 = vrot.slane %v84, %v192
  %v194 = vlaneseq
  %v195 = vshrl.u32 %v194, 7
  %v196 = vsub.s32 2, %v195
  %v197 = vrot.slane %v84, %v196
  %v198 = vlaneseq
  %v199 = vshrl.u32 %v198, 7
  %v200 = vsub.s32 3, %v199
  %v201 = vrot.slane %v84, %v200
  %v206 = vadd.f32 %v154, %v189
  %v207 = vadd.f32 %v155, %v197
  %v208 = vadd.f32 %v156, %v201
  %v209 = vadd.f32 %v157, %v189
  %v210 = vadd.f32 %v158, %v193
  %v211 = vadd.f32 %v159, %v197
  %v212 = vadd.f32 %v160, %v201
  %v213 = vadd.f32 %v161, %v189
  %v214 = vadd.f32 %v162, %v193
  %v215 = vadd.f32 %v163, %v197
  %v216 = vadd.f32 %v164, %v201
  %v217 = vadd.f32 %v165, %v189
  %v218 = vadd.f32 %v166, %v193
  %v219 = vadd.f32 %v167, %v197
  %v220 = vadd.f32 %v168, %v201
  %v221 = vadd.f32 %v169, %v189
  %v222 = vadd.f32 %v170, %v193
  %v223 = vadd.f32 %v171, %v197
  %v224 = vadd.f32 %v172, %v201
  %v225 = vadd.f32 %v173, %v189
  %v226 = vadd.f32 %v174, %v193
  %v227 = vadd.f32 %v175, %v197
  %v228 = vadd.f32 %v176, %v201
  %v229 = vadd.f32 %v177, %v189
  %v230 = vadd.f32 %v178, %v193
  %v231 = vadd.f32 %v179, %v197
  %v232 = vadd.f32 %v180, %v201
  %v233 = vadd.f32 %v181, %v189
  %v234 = vadd.f32 %v182, %v193
  %v235 = vadd.f32 %v183, %v197
  %v236 = vadd.f32 %v184, %v201
  %v237 = vxor.u32 %v206, 2147483648
  %v238 = vmul.f32 %v237, 1.442695
  %v239 = vpow.pop %v238
  %v240 = vadd.f32 %v239, 1.0
  %v241 = vrcp.pop %v240
  %v242 = vmul.f32 1.0, %v241
  %v243 = vtanh.pop %v207
  %v244 = vxor.u32 %v208, 2147483648
  %v245 = vmul.f32 %v244, 1.442695
  %v246 = vpow.pop %v245
  %v247 = vadd.f32 %v246, 1.0
  %v248 = vrcp.pop %v247
  %v249 = vmul.f32 1.0, %v248
  %v250 = vmul.f32 %v242, %v243
  %v251 = vtanh.pop %v250
  %v252 = vmul.f32 %v249, %v251
  %253 = vmatprep.subr.mxu0 %v81
  %254 = vmatpush1.msra.mxu0 %v80
  %255 = vmatprep.subr.mxu0 %v77
  %256 = vmatpush1.msra.mxu0 %v76
  %257 = vmatprep.subr.mxu0 %v73
  %258 = vmatpush1.msra.mxu0 %v72
  %259 = vmatprep.subr.mxu0 %v69
  %260 = vmatpush1.msra.mxu0 %v68
  %261 = vmatprep.subr.mxu0 %v65
  %262 = vmatpush1.msra.mxu0 %v64
  %263 = vmatprep.subr.mxu0 %v61
  %264 = vmatpush1.msra.mxu0 %v60
  %265 = vmatprep.subr.mxu0 %v57
  %266 = vmatpush1.msra.mxu0 %v56
  %267 = vmatprep.subr.mxu0 %v53
  %268 = vmatpush1.msra.mxu0 %v52
  %269 = vmatprep.subr.mxu0 %v49
  %270 = vmatpush1.msra.mxu0 %v48
  %271 = vmatprep.subr.mxu0 %v45
  %272 = vmatpush1.msra.mxu0 %v44
  %273 = vmatprep.subr.mxu0 %v41
  %274 = vmatpush1.msra.mxu0 %v40
  %275 = vmatprep.subr.mxu0 %v37
  %276 = vmatpush1.msra.mxu0 %v36
  %277 = vmatprep.subr.mxu0 %v33
  %278 = vmatpush1.msra.mxu0 %v32
  %279 = vmatprep.subr.mxu0 %v29
  %280 = vmatpush1.msra.mxu0 %v28
  %281 = vmatprep.subr.mxu0 %v25
  %282 = vmatpush1.msra.mxu0 %v24
  %283 = vmatprep.subr.mxu0 %v21
  %284 = vmatpush1.msra.mxu0 %v20
  %285 = vmatprep.subr.mxu0 0.0
  %286 = vmatpush2.msra.mxu0 0.0
  %287 = vmatprep.subr.mxu0 0.0
  %288 = vmatpush2.msra.mxu0 0.0
  %289 = vmatprep.subr.mxu0 0.0
  %290 = vmatpush2.msra.mxu0 0.0
  %291 = vmatprep.subr.mxu0 0.0
  %292 = vmatpush2.msra.mxu0 0.0
  %293 = vmatprep.subr.mxu0 0.0
  %294 = vmatpush2.msra.mxu0 0.0
  %295 = vmatprep.subr.mxu0 0.0
  %296 = vmatpush2.msra.mxu0 0.0
  %297 = vmatprep.subr.mxu0 0.0
  %298 = vmatpush2.msra.mxu0 0.0
  %299 = vmatprep.subr.mxu0 0.0
  %300 = vmatpush2.msra.mxu0 0.0
  %301 = vmatprep.subr.mxu0 0.0
  %302 = vmatpush2.msra.mxu0 0.0
  %303 = vmatprep.subr.mxu0 0.0
  %304 = vmatpush2.msra.mxu0 0.0
  %305 = vmatprep.subr.mxu0 0.0
  %306 = vmatpush2.msra.mxu0 0.0
  %307 = vmatprep.subr.mxu0 0.0
  %308 = vmatpush2.msra.mxu0 0.0
  %309 = vmatprep.subr.mxu0 0.0
  %310 = vmatpush2.msra.mxu0 0.0
  %311 = vmatprep.subr.mxu0 0.0
  %312 = vmatpush2.msra.mxu0 0.0
  %313 = vmatprep.subr.mxu0 0.0
  %314 = vmatpush2.msra.mxu0 0.0
  %315 = vmatprep.subr.mxu0 0.0
  %316 = vmatpush2.msra.mxu0 0.0
  %317 = vmatprep.mubr.f32.mxu0 0.0
  %318 = vmatmul.mubr.f32.gmra.mxu0 %v252
  %v319 = vpop.f32.mrf.mxu0
  %v320 = vadd.f32 0.0, %v319
  %v321 = vpop.f32.mrf.mxu0
  %v322 = vadd.f32 0.0, %v321
  %323 = vdwg.mxu0
  %324 = vmatprep.subr.mxu0 %v83
  %325 = vmatpush1.msra.mxu0 %v82
  %326 = vmatprep.subr.mxu0 %v79
  %327 = vmatpush1.msra.mxu0 %v78
  %328 = vmatprep.subr.mxu0 %v75
  %329 = vmatpush1.msra.mxu0 %v74
  %330 = vmatprep.subr.mxu0 %v71
  %331 = vmatpush1.msra.mxu0 %v70
  %332 = vmatprep.subr.mxu0 %v67
  %333 = vmatpush1.msra.mxu0 %v66
  %334 = vmatprep.subr.mxu0 %v63
  %335 = vmatpush1.msra.mxu0 %v62
  %336 = vmatprep.subr.mxu0 %v59
  %337 = vmatpush1.msra.mxu0 %v58
  %338 = vmatprep.subr.mxu0 %v55
  %339 = vmatpush1.msra.mxu0 %v54
  %340 = vmatprep.subr.mxu0 %v51
  %341 = vmatpush1.msra.mxu0 %v50
  %342 = vmatprep.subr.mxu0 %v47
  %343 = vmatpush1.msra.mxu0 %v46
  %344 = vmatprep.subr.mxu0 %v43
  %345 = vmatpush1.msra.mxu0 %v42
  %346 = vmatprep.subr.mxu0 %v39
  %347 = vmatpush1.msra.mxu0 %v38
  %348 = vmatprep.subr.mxu0 %v35
  %349 = vmatpush1.msra.mxu0 %v34
  %350 = vmatprep.subr.mxu0 %v31
  %351 = vmatpush1.msra.mxu0 %v30
  %352 = vmatprep.subr.mxu0 %v27
  %353 = vmatpush1.msra.mxu0 %v26
  %354 = vmatprep.subr.mxu0 %v23
  %355 = vmatpush1.msra.mxu0 %v22
  %356 = vmatprep.subr.mxu0 0.0
  %357 = vmatpush2.msra.mxu0 0.0
  %358 = vmatprep.subr.mxu0 0.0
  %359 = vmatpush2.msra.mxu0 0.0
  %360 = vmatprep.subr.mxu0 0.0
  %361 = vmatpush2.msra.mxu0 0.0
  %362 = vmatprep.subr.mxu0 0.0
  %363 = vmatpush2.msra.mxu0 0.0
  %364 = vmatprep.subr.mxu0 0.0
  %365 = vmatpush2.msra.mxu0 0.0
  %366 = vmatprep.subr.mxu0 0.0
  %367 = vmatpush2.msra.mxu0 0.0
  %368 = vmatprep.subr.mxu0 0.0
  %369 = vmatpush2.msra.mxu0 0.0
  %370 = vmatprep.subr.mxu0 0.0
  %371 = vmatpush2.msra.mxu0 0.0
  %372 = vmatprep.subr.mxu0 0.0
  %373 = vmatpush2.msra.mxu0 0.0
  %374 = vmatprep.subr.mxu0 0.0
  %375 = vmatpush2.msra.mxu0 0.0
  %376 = vmatprep.subr.mxu0 0.0
  %377 = vmatpush2.msra.mxu0 0.0
  %378 = vmatprep.subr.mxu0 0.0
  %379 = vmatpush2.msra.mxu0 0.0
  %380 = vmatprep.subr.mxu0 0.0
  %381 = vmatpush2.msra.mxu0 0.0
  %382 = vmatprep.subr.mxu0 0.0
  %383 = vmatpush2.msra.mxu0 0.0
  %384 = vmatprep.subr.mxu0 0.0
  %385 = vmatpush2.msra.mxu0 0.0
  %386 = vmatprep.subr.mxu0 0.0
  %387 = vmatpush2.msra.mxu0 0.0
  %388 = vmatprep.mubr.f32.mxu0 0.0
  %389 = vmatmul.mubr.f32.gmra.mxu0 %v252
  %v390 = vpop.f32.mrf.mxu0
  %v391 = vadd.f32 0.0, %v390
  %v392 = vpop.f32.mrf.mxu0
  %v393 = vadd.f32 0.0, %v392
  %394 = vdwg.mxu0
  %v395 = vadd.f32 %v209, %v320
  %v396 = vadd.f32 %v210, %v322
  %v397 = vadd.f32 %v211, %v391
  %v398 = vadd.f32 %v212, %v393
  %v399 = vxor.u32 %v395, 2147483648
  %v400 = vmul.f32 %v399, 1.442695
  %v401 = vpow.pop %v400
  %v402 = vadd.f32 %v401, 1.0
  %v403 = vrcp.pop %v402
  %v404 = vmul.f32 1.0, %v403
  %v405 = vxor.u32 %v396, 2147483648
  %v406 = vmul.f32 %v405, 1.442695
  %v407 = vpow.pop %v406
  %v408 = vadd.f32 %v407, 1.0
  %v409 = vrcp.pop %v408
  %v410 = vmul.f32 1.0, %v409
  %v411 = vtanh.pop %v397
  %v412 = vxor.u32 %v398, 2147483648
  %v413 = vmul.f32 %v412, 1.442695
  %v414 = vpow.pop %v413
  %v415 = vadd.f32 %v414, 1.0
  %v416 = vrcp.pop %v415
  %v417 = vmul.f32 1.0, %v416
  %v418 = vmul.f32 %v410, %v250
  %v419 = vmul.f32 %v404, %v411
  %v420 = vadd.f32 %v418, %v419
  %v421 = vtanh.pop %v420
  %v422 = vmul.f32 %v417, %v421
  %423 = vmatprep.subr.mxu0 %v81
  %424 = vmatpush1.msra.mxu0 %v80
  %425 = vmatprep.subr.mxu0 %v77
  %426 = vmatpush1.msra.mxu0 %v76
  %427 = vmatprep.subr.mxu0 %v73
  %428 = vmatpush1.msra.mxu0 %v72
  %429 = vmatprep.subr.mxu0 %v69
  %430 = vmatpush1.msra.mxu0 %v68
  %431 = vmatprep.subr.mxu0 %v65
  %432 = vmatpush1.msra.mxu0 %v64
  %433 = vmatprep.subr.mxu0 %v61
  %434 = vmatpush1.msra.mxu0 %v60
  %435 = vmatprep.subr.mxu0 %v57
  %436 = vmatpush1.msra.mxu0 %v56
  %437 = vmatprep.subr.mxu0 %v53
  %438 = vmatpush1.msra.mxu0 %v52
  %439 = vmatprep.subr.mxu0 %v49
  %440 = vmatpush1.msra.mxu0 %v48
  %441 = vmatprep.subr.mxu0 %v45
  %442 = vmatpush1.msra.mxu0 %v44
  %443 = vmatprep.subr.mxu0 %v41
  %444 = vmatpush1.msra.mxu0 %v40
  %445 = vmatprep.subr.mxu0 %v37
  %446 = vmatpush1.msra.mxu0 %v36
  %447 = vmatprep.subr.mxu0 %v33
  %448 = vmatpush1.msra.mxu0 %v32
  %449 = vmatprep.subr.mxu0 %v29
  %450 = vmatpush1.msra.mxu0 %v28
  %451 = vmatprep.subr.mxu0 %v25
  %452 = vmatpush1.msra.mxu0 %v24
  %453 = vmatprep.subr.mxu0 %v21
  %454 = vmatpush1.msra.mxu0 %v20
  %455 = vmatprep.subr.mxu0 0.0
  %456 = vmatpush2.msra.mxu0 0.0
  %457 = vmatprep.subr.mxu0 0.0
  %458 = vmatpush2.msra.mxu0 0.0
  %459 = vmatprep.subr.mxu0 0.0
  %460 = vmatpush2.msra.mxu0 0.0
  %461 = vmatprep.subr.mxu0 0.0
  %462 = vmatpush2.msra.mxu0 0.0
  %463 = vmatprep.subr.mxu0 0.0
  %464 = vmatpush2.msra.mxu0 0.0
  %465 = vmatprep.subr.mxu0 0.0
  %466 = vmatpush2.msra.mxu0 0.0
  %467 = vmatprep.subr.mxu0 0.0
  %468 = vmatpush2.msra.mxu0 0.0
  %469 = vmatprep.subr.mxu0 0.0
  %470 = vmatpush2.msra.mxu0 0.0
  %471 = vmatprep.subr.mxu0 0.0
  %472 = vmatpush2.msra.mxu0 0.0
  %473 = vmatprep.subr.mxu0 0.0
  %474 = vmatpush2.msra.mxu0 0.0
  %475 = vmatprep.subr.mxu0 0.0
  %476 = vmatpush2.msra.mxu0 0.0
  %477 = vmatprep.subr.mxu0 0.0
  %478 = vmatpush2.msra.mxu0 0.0
  %479 = vmatprep.subr.mxu0 0.0
  %480 = vmatpush2.msra.mxu0 0.0
  %481 = vmatprep.subr.mxu0 0.0
  %482 = vmatpush2.msra.mxu0 0.0
  %483 = vmatprep.subr.mxu0 0.0
  %484 = vmatpush2.msra.mxu0 0.0
  %485 = vmatprep.subr.mxu0 0.0
  %486 = vmatpush2.msra.mxu0 0.0
  %487 = vmatprep.mubr.f32.mxu0 0.0
  %488 = vmatmul.mubr.f32.gmra.mxu0 %v422
  %v489 = vpop.f32.mrf.mxu0
  %v490 = vadd.f32 0.0, %v489
  %v491 = vpop.f32.mrf.mxu0
  %v492 = vadd.f32 0.0, %v491
  %493 = vdwg.mxu0
  %494 = vmatprep.subr.mxu0 %v83
  %495 = vmatpush1.msra.mxu0 %v82
  %496 = vmatprep.subr.mxu0 %v79
  %497 = vmatpush1.msra.mxu0 %v78
  %498 = vmatprep.subr.mxu0 %v75
  %499 = vmatpush1.msra.mxu0 %v74
  %500 = vmatprep.subr.mxu0 %v71
  %501 = vmatpush1.msra.mxu0 %v70
  %502 = vmatprep.subr.mxu0 %v67
  %503 = vmatpush1.msra.mxu0 %v66
  %504 = vmatprep.subr.mxu0 %v63
  %505 = vmatpush1.msra.mxu0 %v62
  %506 = vmatprep.subr.mxu0 %v59
  %507 = vmatpush1.msra.mxu0 %v58
  %508 = vmatprep.subr.mxu0 %v55
  %509 = vmatpush1.msra.mxu0 %v54
  %510 = vmatprep.subr.mxu0 %v51
  %511 = vmatpush1.msra.mxu0 %v50
  %512 = vmatprep.subr.mxu0 %v47
  %513 = vmatpush1.msra.mxu0 %v46
  %514 = vmatprep.subr.mxu0 %v43
  %515 = vmatpush1.msra.mxu0 %v42
  %516 = vmatprep.subr.mxu0 %v39
  %517 = vmatpush1.msra.mxu0 %v38
  %518 = vmatprep.subr.mxu0 %v35
  %519 = vmatpush1.msra.mxu0 %v34
  %520 = vmatprep.subr.mxu0 %v31
  %521 = vmatpush1.msra.mxu0 %v30
  %522 = vmatprep.subr.mxu0 %v27
  %523 = vmatpush1.msra.mxu0 %v26
  %524 = vmatprep.subr.mxu0 %v23
  %525 = vmatpush1.msra.mxu0 %v22
  %526 = vmatprep.subr.mxu0 0.0
  %527 = vmatpush2.msra.mxu0 0.0
  %528 = vmatprep.subr.mxu0 0.0
  %529 = vmatpush2.msra.mxu0 0.0
  %530 = vmatprep.subr.mxu0 0.0
  %531 = vmatpush2.msra.mxu0 0.0
  %532 = vmatprep.subr.mxu0 0.0
  %533 = vmatpush2.msra.mxu0 0.0
  %534 = vmatprep.subr.mxu0 0.0
  %535 = vmatpush2.msra.mxu0 0.0
  %536 = vmatprep.subr.mxu0 0.0
  %537 = vmatpush2.msra.mxu0 0.0
  %538 = vmatprep.subr.mxu0 0.0
  %539 = vmatpush2.msra.mxu0 0.0
  %540 = vmatprep.subr.mxu0 0.0
  %541 = vmatpush2.msra.mxu0 0.0
  %542 = vmatprep.subr.mxu0 0.0
  %543 = vmatpush2.msra.mxu0 0.0
  %544 = vmatprep.subr.mxu0 0.0
  %545 = vmatpush2.msra.mxu0 0.0
  %546 = vmatprep.subr.mxu0 0.0
  %547 = vmatpush2.msra.mxu0 0.0
  %548 = vmatprep.subr.mxu0 0.0
  %549 = vmatpush2.msra.mxu0 0.0
  %550 = vmatprep.subr.mxu0 0.0
  %551 = vmatpush2.msra.mxu0 0.0
  %552 = vmatprep.subr.mxu0 0.0
  %553 = vmatpush2.msra.mxu0 0.0
  %554 = vmatprep.subr.mxu0 0.0
  %555 = vmatpush2.msra.mxu0 0.0
  %556 = vmatprep.subr.mxu0 0.0
  %557 = vmatpush2.msra.mxu0 0.0
  %558 = vmatprep.mubr.f32.mxu0 0.0
  %559 = vmatmul.mubr.f32.gmra.mxu0 %v422
  %v560 = vpop.f32.mrf.mxu0
  %v561 = vadd.f32 0.0, %v560
  %v562 = vpop.f32.mrf.mxu0
  %v563 = vadd.f32 0.0, %v562
  %564 = vdwg.mxu0
  %v565 = vadd.f32 %v213, %v490
  %v566 = vadd.f32 %v214, %v492
  %v567 = vadd.f32 %v215, %v561
  %v568 = vadd.f32 %v216, %v563
  %v569 = vxor.u32 %v565, 2147483648
  %v570 = vmul.f32 %v569, 1.442695
  %v571 = vpow.pop %v570
  %v572 = vadd.f32 %v571, 1.0
  %v573 = vrcp.pop %v572
  %v574 = vmul.f32 1.0, %v573
  %v575 = vxor.u32 %v566, 2147483648
  %v576 = vmul.f32 %v575, 1.442695
  %v577 = vpow.pop %v576
  %v578 = vadd.f32 %v577, 1.0
  %v579 = vrcp.pop %v578
  %v580 = vmul.f32 1.0, %v579
  %v581 = vtanh.pop %v567
  %v582 = vxor.u32 %v568, 2147483648
  %v583 = vmul.f32 %v582, 1.442695
  %v584 = vpow.pop %v583
  %v585 = vadd.f32 %v584, 1.0
  %v586 = vrcp.pop %v585
  %v587 = vmul.f32 1.0, %v586
  %v588 = vmul.f32 %v580, %v420
  %v589 = vmul.f32 %v574, %v581
  %v590 = vadd.f32 %v588, %v589
  %v591 = vtanh.pop %v590
  %v592 = vmul.f32 %v587, %v591
  %593 = vmatprep.subr.mxu0 %v81
  %594 = vmatpush1.msra.mxu0 %v80
  %595 = vmatprep.subr.mxu0 %v77
  %596 = vmatpush1.msra.mxu0 %v76
  %597 = vmatprep.subr.mxu0 %v73
  %598 = vmatpush1.msra.mxu0 %v72
  %599 = vmatprep.subr.mxu0 %v69
  %600 = vmatpush1.msra.mxu0 %v68
  %601 = vmatprep.subr.mxu0 %v65
  %602 = vmatpush1.msra.mxu0 %v64
  %603 = vmatprep.subr.mxu0 %v61
  %604 = vmatpush1.msra.mxu0 %v60
  %605 = vmatprep.subr.mxu0 %v57
  %606 = vmatpush1.msra.mxu0 %v56
  %607 = vmatprep.subr.mxu0 %v53
  %608 = vmatpush1.msra.mxu0 %v52
  %609 = vmatprep.subr.mxu0 %v49
  %610 = vmatpush1.msra.mxu0 %v48
  %611 = vmatprep.subr.mxu0 %v45
  %612 = vmatpush1.msra.mxu0 %v44
  %613 = vmatprep.subr.mxu0 %v41
  %614 = vmatpush1.msra.mxu0 %v40
  %615 = vmatprep.subr.mxu0 %v37
  %616 = vmatpush1.msra.mxu0 %v36
  %617 = vmatprep.subr.mxu0 %v33
  %618 = vmatpush1.msra.mxu0 %v32
  %619 = vmatprep.subr.mxu0 %v29
  %620 = vmatpush1.msra.mxu0 %v28
  %621 = vmatprep.subr.mxu0 %v25
  %622 = vmatpush1.msra.mxu0 %v24
  %623 = vmatprep.subr.mxu0 %v21
  %624 = vmatpush1.msra.mxu0 %v20
  %625 = vmatprep.subr.mxu0 0.0
  %626 = vmatpush2.msra.mxu0 0.0
  %627 = vmatprep.subr.mxu0 0.0
  %628 = vmatpush2.msra.mxu0 0.0
  %629 = vmatprep.subr.mxu0 0.0
  %630 = vmatpush2.msra.mxu0 0.0
  %631 = vmatprep.subr.mxu0 0.0
  %632 = vmatpush2.msra.mxu0 0.0
  %633 = vmatprep.subr.mxu0 0.0
  %634 = vmatpush2.msra.mxu0 0.0
  %635 = vmatprep.subr.mxu0 0.0
  %636 = vmatpush2.msra.mxu0 0.0
  %637 = vmatprep.subr.mxu0 0.0
  %638 = vmatpush2.msra.mxu0 0.0
  %639 = vmatprep.subr.mxu0 0.0
  %640 = vmatpush2.msra.mxu0 0.0
  %641 = vmatprep.subr.mxu0 0.0
  %642 = vmatpush2.msra.mxu0 0.0
  %643 = vmatprep.subr.mxu0 0.0
  %644 = vmatpush2.msra.mxu0 0.0
  %645 = vmatprep.subr.mxu0 0.0
  %646 = vmatpush2.msra.mxu0 0.0
  %647 = vmatprep.subr.mxu0 0.0
  %648 = vmatpush2.msra.mxu0 0.0
  %649 = vmatprep.subr.mxu0 0.0
  %650 = vmatpush2.msra.mxu0 0.0
  %651 = vmatprep.subr.mxu0 0.0
  %652 = vmatpush2.msra.mxu0 0.0
  %653 = vmatprep.subr.mxu0 0.0
  %654 = vmatpush2.msra.mxu0 0.0
  %655 = vmatprep.subr.mxu0 0.0
  %656 = vmatpush2.msra.mxu0 0.0
  %657 = vmatprep.mubr.f32.mxu0 0.0
  %658 = vmatmul.mubr.f32.gmra.mxu0 %v592
  %v659 = vpop.f32.mrf.mxu0
  %v660 = vadd.f32 0.0, %v659
  %v661 = vpop.f32.mrf.mxu0
  %v662 = vadd.f32 0.0, %v661
  %663 = vdwg.mxu0
  %664 = vmatprep.subr.mxu0 %v83
  %665 = vmatpush1.msra.mxu0 %v82
  %666 = vmatprep.subr.mxu0 %v79
  %667 = vmatpush1.msra.mxu0 %v78
  %668 = vmatprep.subr.mxu0 %v75
  %669 = vmatpush1.msra.mxu0 %v74
  %670 = vmatprep.subr.mxu0 %v71
  %671 = vmatpush1.msra.mxu0 %v70
  %672 = vmatprep.subr.mxu0 %v67
  %673 = vmatpush1.msra.mxu0 %v66
  %674 = vmatprep.subr.mxu0 %v63
  %675 = vmatpush1.msra.mxu0 %v62
  %676 = vmatprep.subr.mxu0 %v59
  %677 = vmatpush1.msra.mxu0 %v58
  %678 = vmatprep.subr.mxu0 %v55
  %679 = vmatpush1.msra.mxu0 %v54
  %680 = vmatprep.subr.mxu0 %v51
  %681 = vmatpush1.msra.mxu0 %v50
  %682 = vmatprep.subr.mxu0 %v47
  %683 = vmatpush1.msra.mxu0 %v46
  %684 = vmatprep.subr.mxu0 %v43
  %685 = vmatpush1.msra.mxu0 %v42
  %686 = vmatprep.subr.mxu0 %v39
  %687 = vmatpush1.msra.mxu0 %v38
  %688 = vmatprep.subr.mxu0 %v35
  %689 = vmatpush1.msra.mxu0 %v34
  %690 = vmatprep.subr.mxu0 %v31
  %691 = vmatpush1.msra.mxu0 %v30
  %692 = vmatprep.subr.mxu0 %v27
  %693 = vmatpush1.msra.mxu0 %v26
  %694 = vmatprep.subr.mxu0 %v23
  %695 = vmatpush1.msra.mxu0 %v22
  %696 = vmatprep.subr.mxu0 0.0
  %697 = vmatpush2.msra.mxu0 0.0
  %698 = vmatprep.subr.mxu0 0.0
  %699 = vmatpush2.msra.mxu0 0.0
  %700 = vmatprep.subr.mxu0 0.0
  %701 = vmatpush2.msra.mxu0 0.0
  %702 = vmatprep.subr.mxu0 0.0
  %703 = vmatpush2.msra.mxu0 0.0
  %704 = vmatprep.subr.mxu0 0.0
  %705 = vmatpush2.msra.mxu0 0.0
  %706 = vmatprep.subr.mxu0 0.0
  %707 = vmatpush2.msra.mxu0 0.0
  %708 = vmatprep.subr.mxu0 0.0
  %709 = vmatpush2.msra.mxu0 0.0
  %710 = vmatprep.subr.mxu0 0.0
  %711 = vmatpush2.msra.mxu0 0.0
  %712 = vmatprep.subr.mxu0 0.0
  %713 = vmatpush2.msra.mxu0 0.0
  %714 = vmatprep.subr.mxu0 0.0
  %715 = vmatpush2.msra.mxu0 0.0
  %716 = vmatprep.subr.mxu0 0.0
  %717 = vmatpush2.msra.mxu0 0.0
  %718 = vmatprep.subr.mxu0 0.0
  %719 = vmatpush2.msra.mxu0 0.0
  %720 = vmatprep.subr.mxu0 0.0
  %721 = vmatpush2.msra.mxu0 0.0
  %722 = vmatprep.subr.mxu0 0.0
  %723 = vmatpush2.msra.mxu0 0.0
  %724 = vmatprep.subr.mxu0 0.0
  %725 = vmatpush2.msra.mxu0 0.0
  %726 = vmatprep.subr.mxu0 0.0
  %727 = vmatpush2.msra.mxu0 0.0
  %728 = vmatprep.mubr.f32.mxu0 0.0
  %729 = vmatmul.mubr.f32.gmra.mxu0 %v592
  %v730 = vpop.f32.mrf.mxu0
  %v731 = vadd.f32 0.0, %v730
  %v732 = vpop.f32.mrf.mxu0
  %v733 = vadd.f32 0.0, %v732
  %734 = vdwg.mxu0
  %v735 = vadd.f32 %v217, %v660
  %v736 = vadd.f32 %v218, %v662
  %v737 = vadd.f32 %v219, %v731
  %v738 = vadd.f32 %v220, %v733
  %v739 = vxor.u32 %v735, 2147483648
  %v740 = vmul.f32 %v739, 1.442695
  %v741 = vpow.pop %v740
  %v742 = vadd.f32 %v741, 1.0
  %v743 = vrcp.pop %v742
  %v744 = vmul.f32 1.0, %v743
  %v745 = vxor.u32 %v736, 2147483648
  %v746 = vmul.f32 %v745, 1.442695
  %v747 = vpow.pop %v746
  %v748 = vadd.f32 %v747, 1.0
  %v749 = vrcp.pop %v748
  %v750 = vmul.f32 1.0, %v749
  %v751 = vtanh.pop %v737
  %v752 = vxor.u32 %v738, 2147483648
  %v753 = vmul.f32 %v752, 1.442695
  %v754 = vpow.pop %v753
  %v755 = vadd.f32 %v754, 1.0
  %v756 = vrcp.pop %v755
  %v757 = vmul.f32 1.0, %v756
  %v758 = vmul.f32 %v750, %v590
  %v759 = vmul.f32 %v744, %v751
  %v760 = vadd.f32 %v758, %v759
  %v761 = vtanh.pop %v760
  %v762 = vmul.f32 %v757, %v761
  %763 = vmatprep.subr.mxu0 %v81
  %764 = vmatpush1.msra.mxu0 %v80
  %765 = vmatprep.subr.mxu0 %v77
  %766 = vmatpush1.msra.mxu0 %v76
  %767 = vmatprep.subr.mxu0 %v73
  %768 = vmatpush1.msra.mxu0 %v72
  %769 = vmatprep.subr.mxu0 %v69
  %770 = vmatpush1.msra.mxu0 %v68
  %771 = vmatprep.subr.mxu0 %v65
  %772 = vmatpush1.msra.mxu0 %v64
  %773 = vmatprep.subr.mxu0 %v61
  %774 = vmatpush1.msra.mxu0 %v60
  %775 = vmatprep.subr.mxu0 %v57
  %776 = vmatpush1.msra.mxu0 %v56
  %777 = vmatprep.subr.mxu0 %v53
  %778 = vmatpush1.msra.mxu0 %v52
  %779 = vmatprep.subr.mxu0 %v49
  %780 = vmatpush1.msra.mxu0 %v48
  %781 = vmatprep.subr.mxu0 %v45
  %782 = vmatpush1.msra.mxu0 %v44
  %783 = vmatprep.subr.mxu0 %v41
  %784 = vmatpush1.msra.mxu0 %v40
  %785 = vmatprep.subr.mxu0 %v37
  %786 = vmatpush1.msra.mxu0 %v36
  %787 = vmatprep.subr.mxu0 %v33
  %788 = vmatpush1.msra.mxu0 %v32
  %789 = vmatprep.subr.mxu0 %v29
  %790 = vmatpush1.msra.mxu0 %v28
  %791 = vmatprep.subr.mxu0 %v25
  %792 = vmatpush1.msra.mxu0 %v24
  %793 = vmatprep.subr.mxu0 %v21
  %794 = vmatpush1.msra.mxu0 %v20
  %795 = vmatprep.subr.mxu0 0.0
  %796 = vmatpush2.msra.mxu0 0.0
  %797 = vmatprep.subr.mxu0 0.0
  %798 = vmatpush2.msra.mxu0 0.0
  %799 = vmatprep.subr.mxu0 0.0
  %800 = vmatpush2.msra.mxu0 0.0
  %801 = vmatprep.subr.mxu0 0.0
  %802 = vmatpush2.msra.mxu0 0.0
  %803 = vmatprep.subr.mxu0 0.0
  %804 = vmatpush2.msra.mxu0 0.0
  %805 = vmatprep.subr.mxu0 0.0
  %806 = vmatpush2.msra.mxu0 0.0
  %807 = vmatprep.subr.mxu0 0.0
  %808 = vmatpush2.msra.mxu0 0.0
  %809 = vmatprep.subr.mxu0 0.0
  %810 = vmatpush2.msra.mxu0 0.0
  %811 = vmatprep.subr.mxu0 0.0
  %812 = vmatpush2.msra.mxu0 0.0
  %813 = vmatprep.subr.mxu0 0.0
  %814 = vmatpush2.msra.mxu0 0.0
  %815 = vmatprep.subr.mxu0 0.0
  %816 = vmatpush2.msra.mxu0 0.0
  %817 = vmatprep.subr.mxu0 0.0
  %818 = vmatpush2.msra.mxu0 0.0
  %819 = vmatprep.subr.mxu0 0.0
  %820 = vmatpush2.msra.mxu0 0.0
  %821 = vmatprep.subr.mxu0 0.0
  %822 = vmatpush2.msra.mxu0 0.0
  %823 = vmatprep.subr.mxu0 0.0
  %824 = vmatpush2.msra.mxu0 0.0
  %825 = vmatprep.subr.mxu0 0.0
  %826 = vmatpush2.msra.mxu0 0.0
  %827 = vmatprep.mubr.f32.mxu0 0.0
  %828 = vmatmul.mubr.f32.gmra.mxu0 %v762
  %v829 = vpop.f32.mrf.mxu0
  %v830 = vadd.f32 0.0, %v829
  %v831 = vpop.f32.mrf.mxu0
  %v832 = vadd.f32 0.0, %v831
  %833 = vdwg.mxu0
  %834 = vmatprep.subr.mxu0 %v83
  %835 = vmatpush1.msra.mxu0 %v82
  %836 = vmatprep.subr.mxu0 %v79
  %837 = vmatpush1.msra.mxu0 %v78
  %838 = vmatprep.subr.mxu0 %v75
  %839 = vmatpush1.msra.mxu0 %v74
  %840 = vmatprep.subr.mxu0 %v71
  %841 = vmatpush1.msra.mxu0 %v70
  %842 = vmatprep.subr.mxu0 %v67
  %843 = vmatpush1.msra.mxu0 %v66
  %844 = vmatprep.subr.mxu0 %v63
  %845 = vmatpush1.msra.mxu0 %v62
  %846 = vmatprep.subr.mxu0 %v59
  %847 = vmatpush1.msra.mxu0 %v58
  %848 = vmatprep.subr.mxu0 %v55
  %849 = vmatpush1.msra.mxu0 %v54
  %850 = vmatprep.subr.mxu0 %v51
  %851 = vmatpush1.msra.mxu0 %v50
  %852 = vmatprep.subr.mxu0 %v47
  %853 = vmatpush1.msra.mxu0 %v46
  %854 = vmatprep.subr.mxu0 %v43
  %855 = vmatpush1.msra.mxu0 %v42
  %856 = vmatprep.subr.mxu0 %v39
  %857 = vmatpush1.msra.mxu0 %v38
  %858 = vmatprep.subr.mxu0 %v35
  %859 = vmatpush1.msra.mxu0 %v34
  %860 = vmatprep.subr.mxu0 %v31
  %861 = vmatpush1.msra.mxu0 %v30
  %862 = vmatprep.subr.mxu0 %v27
  %863 = vmatpush1.msra.mxu0 %v26
  %864 = vmatprep.subr.mxu0 %v23
  %865 = vmatpush1.msra.mxu0 %v22
  %866 = vmatprep.subr.mxu0 0.0
  %867 = vmatpush2.msra.mxu0 0.0
  %868 = vmatprep.subr.mxu0 0.0
  %869 = vmatpush2.msra.mxu0 0.0
  %870 = vmatprep.subr.mxu0 0.0
  %871 = vmatpush2.msra.mxu0 0.0
  %872 = vmatprep.subr.mxu0 0.0
  %873 = vmatpush2.msra.mxu0 0.0
  %874 = vmatprep.subr.mxu0 0.0
  %875 = vmatpush2.msra.mxu0 0.0
  %876 = vmatprep.subr.mxu0 0.0
  %877 = vmatpush2.msra.mxu0 0.0
  %878 = vmatprep.subr.mxu0 0.0
  %879 = vmatpush2.msra.mxu0 0.0
  %880 = vmatprep.subr.mxu0 0.0
  %881 = vmatpush2.msra.mxu0 0.0
  %882 = vmatprep.subr.mxu0 0.0
  %883 = vmatpush2.msra.mxu0 0.0
  %884 = vmatprep.subr.mxu0 0.0
  %885 = vmatpush2.msra.mxu0 0.0
  %886 = vmatprep.subr.mxu0 0.0
  %887 = vmatpush2.msra.mxu0 0.0
  %888 = vmatprep.subr.mxu0 0.0
  %889 = vmatpush2.msra.mxu0 0.0
  %890 = vmatprep.subr.mxu0 0.0
  %891 = vmatpush2.msra.mxu0 0.0
  %892 = vmatprep.subr.mxu0 0.0
  %893 = vmatpush2.msra.mxu0 0.0
  %894 = vmatprep.subr.mxu0 0.0
  %895 = vmatpush2.msra.mxu0 0.0
  %896 = vmatprep.subr.mxu0 0.0
  %897 = vmatpush2.msra.mxu0 0.0
  %898 = vmatprep.mubr.f32.mxu0 0.0
  %899 = vmatmul.mubr.f32.gmra.mxu0 %v762
  %v900 = vpop.f32.mrf.mxu0
  %v901 = vadd.f32 0.0, %v900
  %v902 = vpop.f32.mrf.mxu0
  %v903 = vadd.f32 0.0, %v902
  %904 = vdwg.mxu0
  %v905 = vadd.f32 %v221, %v830
  %v906 = vadd.f32 %v222, %v832
  %v907 = vadd.f32 %v223, %v901
  %v908 = vadd.f32 %v224, %v903
  %v909 = vxor.u32 %v905, 2147483648
  %v910 = vmul.f32 %v909, 1.442695
  %v911 = vpow.pop %v910
  %v912 = vadd.f32 %v911, 1.0
  %v913 = vrcp.pop %v912
  %v914 = vmul.f32 1.0, %v913
  %v915 = vxor.u32 %v906, 2147483648
  %v916 = vmul.f32 %v915, 1.442695
  %v917 = vpow.pop %v916
  %v918 = vadd.f32 %v917, 1.0
  %v919 = vrcp.pop %v918
  %v920 = vmul.f32 1.0, %v919
  %v921 = vtanh.pop %v907
  %v922 = vxor.u32 %v908, 2147483648
  %v923 = vmul.f32 %v922, 1.442695
  %v924 = vpow.pop %v923
  %v925 = vadd.f32 %v924, 1.0
  %v926 = vrcp.pop %v925
  %v927 = vmul.f32 1.0, %v926
  %v928 = vmul.f32 %v920, %v760
  %v929 = vmul.f32 %v914, %v921
  %v930 = vadd.f32 %v928, %v929
  %v931 = vtanh.pop %v930
  %v932 = vmul.f32 %v927, %v931
  %933 = vmatprep.subr.mxu0 %v81
  %934 = vmatpush1.msra.mxu0 %v80
  %935 = vmatprep.subr.mxu0 %v77
  %936 = vmatpush1.msra.mxu0 %v76
  %937 = vmatprep.subr.mxu0 %v73
  %938 = vmatpush1.msra.mxu0 %v72
  %939 = vmatprep.subr.mxu0 %v69
  %940 = vmatpush1.msra.mxu0 %v68
  %941 = vmatprep.subr.mxu0 %v65
  %942 = vmatpush1.msra.mxu0 %v64
  %943 = vmatprep.subr.mxu0 %v61
  %944 = vmatpush1.msra.mxu0 %v60
  %945 = vmatprep.subr.mxu0 %v57
  %946 = vmatpush1.msra.mxu0 %v56
  %947 = vmatprep.subr.mxu0 %v53
  %948 = vmatpush1.msra.mxu0 %v52
  %949 = vmatprep.subr.mxu0 %v49
  %950 = vmatpush1.msra.mxu0 %v48
  %951 = vmatprep.subr.mxu0 %v45
  %952 = vmatpush1.msra.mxu0 %v44
  %953 = vmatprep.subr.mxu0 %v41
  %954 = vmatpush1.msra.mxu0 %v40
  %955 = vmatprep.subr.mxu0 %v37
  %956 = vmatpush1.msra.mxu0 %v36
  %957 = vmatprep.subr.mxu0 %v33
  %958 = vmatpush1.msra.mxu0 %v32
  %959 = vmatprep.subr.mxu0 %v29
  %960 = vmatpush1.msra.mxu0 %v28
  %961 = vmatprep.subr.mxu0 %v25
  %962 = vmatpush1.msra.mxu0 %v24
  %963 = vmatprep.subr.mxu0 %v21
  %964 = vmatpush1.msra.mxu0 %v20
  %965 = vmatprep.subr.mxu0 0.0
  %966 = vmatpush2.msra.mxu0 0.0
  %967 = vmatprep.subr.mxu0 0.0
  %968 = vmatpush2.msra.mxu0 0.0
  %969 = vmatprep.subr.mxu0 0.0
  %970 = vmatpush2.msra.mxu0 0.0
  %971 = vmatprep.subr.mxu0 0.0
  %972 = vmatpush2.msra.mxu0 0.0
  %973 = vmatprep.subr.mxu0 0.0
  %974 = vmatpush2.msra.mxu0 0.0
  %975 = vmatprep.subr.mxu0 0.0
  %976 = vmatpush2.msra.mxu0 0.0
  %977 = vmatprep.subr.mxu0 0.0
  %978 = vmatpush2.msra.mxu0 0.0
  %979 = vmatprep.subr.mxu0 0.0
  %980 = vmatpush2.msra.mxu0 0.0
  %981 = vmatprep.subr.mxu0 0.0
  %982 = vmatpush2.msra.mxu0 0.0
  %983 = vmatprep.subr.mxu0 0.0
  %984 = vmatpush2.msra.mxu0 0.0
  %985 = vmatprep.subr.mxu0 0.0
  %986 = vmatpush2.msra.mxu0 0.0
  %987 = vmatprep.subr.mxu0 0.0
  %988 = vmatpush2.msra.mxu0 0.0
  %989 = vmatprep.subr.mxu0 0.0
  %990 = vmatpush2.msra.mxu0 0.0
  %991 = vmatprep.subr.mxu0 0.0
  %992 = vmatpush2.msra.mxu0 0.0
  %993 = vmatprep.subr.mxu0 0.0
  %994 = vmatpush2.msra.mxu0 0.0
  %995 = vmatprep.subr.mxu0 0.0
  %996 = vmatpush2.msra.mxu0 0.0
  %997 = vmatprep.mubr.f32.mxu0 0.0
  %998 = vmatmul.mubr.f32.gmra.mxu0 %v932
  %v999 = vpop.f32.mrf.mxu0
  %v1000 = vadd.f32 0.0, %v999
  %v1001 = vpop.f32.mrf.mxu0
  %v1002 = vadd.f32 0.0, %v1001
  %1003 = vdwg.mxu0
  %1004 = vmatprep.subr.mxu0 %v83
  %1005 = vmatpush1.msra.mxu0 %v82
  %1006 = vmatprep.subr.mxu0 %v79
  %1007 = vmatpush1.msra.mxu0 %v78
  %1008 = vmatprep.subr.mxu0 %v75
  %1009 = vmatpush1.msra.mxu0 %v74
  %1010 = vmatprep.subr.mxu0 %v71
  %1011 = vmatpush1.msra.mxu0 %v70
  %1012 = vmatprep.subr.mxu0 %v67
  %1013 = vmatpush1.msra.mxu0 %v66
  %1014 = vmatprep.subr.mxu0 %v63
  %1015 = vmatpush1.msra.mxu0 %v62
  %1016 = vmatprep.subr.mxu0 %v59
  %1017 = vmatpush1.msra.mxu0 %v58
  %1018 = vmatprep.subr.mxu0 %v55
  %1019 = vmatpush1.msra.mxu0 %v54
  %1020 = vmatprep.subr.mxu0 %v51
  %1021 = vmatpush1.msra.mxu0 %v50
  %1022 = vmatprep.subr.mxu0 %v47
  %1023 = vmatpush1.msra.mxu0 %v46
  %1024 = vmatprep.subr.mxu0 %v43
  %1025 = vmatpush1.msra.mxu0 %v42
  %1026 = vmatprep.subr.mxu0 %v39
  %1027 = vmatpush1.msra.mxu0 %v38
  %1028 = vmatprep.subr.mxu0 %v35
  %1029 = vmatpush1.msra.mxu0 %v34
  %1030 = vmatprep.subr.mxu0 %v31
  %1031 = vmatpush1.msra.mxu0 %v30
  %1032 = vmatprep.subr.mxu0 %v27
  %1033 = vmatpush1.msra.mxu0 %v26
  %1034 = vmatprep.subr.mxu0 %v23
  %1035 = vmatpush1.msra.mxu0 %v22
  %1036 = vmatprep.subr.mxu0 0.0
  %1037 = vmatpush2.msra.mxu0 0.0
  %1038 = vmatprep.subr.mxu0 0.0
  %1039 = vmatpush2.msra.mxu0 0.0
  %1040 = vmatprep.subr.mxu0 0.0
  %1041 = vmatpush2.msra.mxu0 0.0
  %1042 = vmatprep.subr.mxu0 0.0
  %1043 = vmatpush2.msra.mxu0 0.0
  %1044 = vmatprep.subr.mxu0 0.0
  %1045 = vmatpush2.msra.mxu0 0.0
  %1046 = vmatprep.subr.mxu0 0.0
  %1047 = vmatpush2.msra.mxu0 0.0
  %1048 = vmatprep.subr.mxu0 0.0
  %1049 = vmatpush2.msra.mxu0 0.0
  %1050 = vmatprep.subr.mxu0 0.0
  %1051 = vmatpush2.msra.mxu0 0.0
  %1052 = vmatprep.subr.mxu0 0.0
  %1053 = vmatpush2.msra.mxu0 0.0
  %1054 = vmatprep.subr.mxu0 0.0
  %1055 = vmatpush2.msra.mxu0 0.0
  %1056 = vmatprep.subr.mxu0 0.0
  %1057 = vmatpush2.msra.mxu0 0.0
  %1058 = vmatprep.subr.mxu0 0.0
  %1059 = vmatpush2.msra.mxu0 0.0
  %1060 = vmatprep.subr.mxu0 0.0
  %1061 = vmatpush2.msra.mxu0 0.0
  %1062 = vmatprep.subr.mxu0 0.0
  %1063 = vmatpush2.msra.mxu0 0.0
  %1064 = vmatprep.subr.mxu0 0.0
  %1065 = vmatpush2.msra.mxu0 0.0
  %1066 = vmatprep.subr.mxu0 0.0
  %1067 = vmatpush2.msra.mxu0 0.0
  %1068 = vmatprep.mubr.f32.mxu0 0.0
  %1069 = vmatmul.mubr.f32.gmra.mxu0 %v932
  %v1070 = vpop.f32.mrf.mxu0
  %v1071 = vadd.f32 0.0, %v1070
  %v1072 = vpop.f32.mrf.mxu0
  %v1073 = vadd.f32 0.0, %v1072
  %1074 = vdwg.mxu0
  %v1075 = vadd.f32 %v225, %v1000
  %v1076 = vadd.f32 %v226, %v1002
  %v1077 = vadd.f32 %v227, %v1071
  %v1078 = vadd.f32 %v228, %v1073
  %v1079 = vxor.u32 %v1075, 2147483648
  %v1080 = vmul.f32 %v1079, 1.442695
  %v1081 = vpow.pop %v1080
  %v1082 = vadd.f32 %v1081, 1.0
  %v1083 = vrcp.pop %v1082
  %v1084 = vmul.f32 1.0, %v1083
  %v1085 = vxor.u32 %v1076, 2147483648
  %v1086 = vmul.f32 %v1085, 1.442695
  %v1087 = vpow.pop %v1086
  %v1088 = vadd.f32 %v1087, 1.0
  %v1089 = vrcp.pop %v1088
  %v1090 = vmul.f32 1.0, %v1089
  %v1091 = vtanh.pop %v1077
  %v1092 = vxor.u32 %v1078, 2147483648
  %v1093 = vmul.f32 %v1092, 1.442695
  %v1094 = vpow.pop %v1093
  %v1095 = vadd.f32 %v1094, 1.0
  %v1096 = vrcp.pop %v1095
  %v1097 = vmul.f32 1.0, %v1096
  %v1098 = vmul.f32 %v1090, %v930
  %v1099 = vmul.f32 %v1084, %v1091
  %v1100 = vadd.f32 %v1098, %v1099
  %v1101 = vtanh.pop %v1100
  %v1102 = vmul.f32 %v1097, %v1101
  %1103 = vmatprep.subr.mxu0 %v81
  %1104 = vmatpush1.msra.mxu0 %v80
  %1105 = vmatprep.subr.mxu0 %v77
  %1106 = vmatpush1.msra.mxu0 %v76
  %1107 = vmatprep.subr.mxu0 %v73
  %1108 = vmatpush1.msra.mxu0 %v72
  %1109 = vmatprep.subr.mxu0 %v69
  %1110 = vmatpush1.msra.mxu0 %v68
  %1111 = vmatprep.subr.mxu0 %v65
  %1112 = vmatpush1.msra.mxu0 %v64
  %1113 = vmatprep.subr.mxu0 %v61
  %1114 = vmatpush1.msra.mxu0 %v60
  %1115 = vmatprep.subr.mxu0 %v57
  %1116 = vmatpush1.msra.mxu0 %v56
  %1117 = vmatprep.subr.mxu0 %v53
  %1118 = vmatpush1.msra.mxu0 %v52
  %1119 = vmatprep.subr.mxu0 %v49
  %1120 = vmatpush1.msra.mxu0 %v48
  %1121 = vmatprep.subr.mxu0 %v45
  %1122 = vmatpush1.msra.mxu0 %v44
  %1123 = vmatprep.subr.mxu0 %v41
  %1124 = vmatpush1.msra.mxu0 %v40
  %1125 = vmatprep.subr.mxu0 %v37
  %1126 = vmatpush1.msra.mxu0 %v36
  %1127 = vmatprep.subr.mxu0 %v33
  %1128 = vmatpush1.msra.mxu0 %v32
  %1129 = vmatprep.subr.mxu0 %v29
  %1130 = vmatpush1.msra.mxu0 %v28
  %1131 = vmatprep.subr.mxu0 %v25
  %1132 = vmatpush1.msra.mxu0 %v24
  %1133 = vmatprep.subr.mxu0 %v21
  %1134 = vmatpush1.msra.mxu0 %v20
  %1135 = vmatprep.subr.mxu0 0.0
  %1136 = vmatpush2.msra.mxu0 0.0
  %1137 = vmatprep.subr.mxu0 0.0
  %1138 = vmatpush2.msra.mxu0 0.0
  %1139 = vmatprep.subr.mxu0 0.0
  %1140 = vmatpush2.msra.mxu0 0.0
  %1141 = vmatprep.subr.mxu0 0.0
  %1142 = vmatpush2.msra.mxu0 0.0
  %1143 = vmatprep.subr.mxu0 0.0
  %1144 = vmatpush2.msra.mxu0 0.0
  %1145 = vmatprep.subr.mxu0 0.0
  %1146 = vmatpush2.msra.mxu0 0.0
  %1147 = vmatprep.subr.mxu0 0.0
  %1148 = vmatpush2.msra.mxu0 0.0
  %1149 = vmatprep.subr.mxu0 0.0
  %1150 = vmatpush2.msra.mxu0 0.0
  %1151 = vmatprep.subr.mxu0 0.0
  %1152 = vmatpush2.msra.mxu0 0.0
  %1153 = vmatprep.subr.mxu0 0.0
  %1154 = vmatpush2.msra.mxu0 0.0
  %1155 = vmatprep.subr.mxu0 0.0
  %1156 = vmatpush2.msra.mxu0 0.0
  %1157 = vmatprep.subr.mxu0 0.0
  %1158 = vmatpush2.msra.mxu0 0.0
  %1159 = vmatprep.subr.mxu0 0.0
  %1160 = vmatpush2.msra.mxu0 0.0
  %1161 = vmatprep.subr.mxu0 0.0
  %1162 = vmatpush2.msra.mxu0 0.0
  %1163 = vmatprep.subr.mxu0 0.0
  %1164 = vmatpush2.msra.mxu0 0.0
  %1165 = vmatprep.subr.mxu0 0.0
  %1166 = vmatpush2.msra.mxu0 0.0
  %1167 = vmatprep.mubr.f32.mxu0 0.0
  %1168 = vmatmul.mubr.f32.gmra.mxu0 %v1102
  %v1169 = vpop.f32.mrf.mxu0
  %v1170 = vadd.f32 0.0, %v1169
  %v1171 = vpop.f32.mrf.mxu0
  %v1172 = vadd.f32 0.0, %v1171
  %1173 = vdwg.mxu0
  %1174 = vmatprep.subr.mxu0 %v83
  %1175 = vmatpush1.msra.mxu0 %v82
  %1176 = vmatprep.subr.mxu0 %v79
  %1177 = vmatpush1.msra.mxu0 %v78
  %1178 = vmatprep.subr.mxu0 %v75
  %1179 = vmatpush1.msra.mxu0 %v74
  %1180 = vmatprep.subr.mxu0 %v71
  %1181 = vmatpush1.msra.mxu0 %v70
  %1182 = vmatprep.subr.mxu0 %v67
  %1183 = vmatpush1.msra.mxu0 %v66
  %1184 = vmatprep.subr.mxu0 %v63
  %1185 = vmatpush1.msra.mxu0 %v62
  %1186 = vmatprep.subr.mxu0 %v59
  %1187 = vmatpush1.msra.mxu0 %v58
  %1188 = vmatprep.subr.mxu0 %v55
  %1189 = vmatpush1.msra.mxu0 %v54
  %1190 = vmatprep.subr.mxu0 %v51
  %1191 = vmatpush1.msra.mxu0 %v50
  %1192 = vmatprep.subr.mxu0 %v47
  %1193 = vmatpush1.msra.mxu0 %v46
  %1194 = vmatprep.subr.mxu0 %v43
  %1195 = vmatpush1.msra.mxu0 %v42
  %1196 = vmatprep.subr.mxu0 %v39
  %1197 = vmatpush1.msra.mxu0 %v38
  %1198 = vmatprep.subr.mxu0 %v35
  %1199 = vmatpush1.msra.mxu0 %v34
  %1200 = vmatprep.subr.mxu0 %v31
  %1201 = vmatpush1.msra.mxu0 %v30
  %1202 = vmatprep.subr.mxu0 %v27
  %1203 = vmatpush1.msra.mxu0 %v26
  %1204 = vmatprep.subr.mxu0 %v23
  %1205 = vmatpush1.msra.mxu0 %v22
  %1206 = vmatprep.subr.mxu0 0.0
  %1207 = vmatpush2.msra.mxu0 0.0
  %1208 = vmatprep.subr.mxu0 0.0
  %1209 = vmatpush2.msra.mxu0 0.0
  %1210 = vmatprep.subr.mxu0 0.0
  %1211 = vmatpush2.msra.mxu0 0.0
  %1212 = vmatprep.subr.mxu0 0.0
  %1213 = vmatpush2.msra.mxu0 0.0
  %1214 = vmatprep.subr.mxu0 0.0
  %1215 = vmatpush2.msra.mxu0 0.0
  %1216 = vmatprep.subr.mxu0 0.0
  %1217 = vmatpush2.msra.mxu0 0.0
  %1218 = vmatprep.subr.mxu0 0.0
  %1219 = vmatpush2.msra.mxu0 0.0
  %1220 = vmatprep.subr.mxu0 0.0
  %1221 = vmatpush2.msra.mxu0 0.0
  %1222 = vmatprep.subr.mxu0 0.0
  %1223 = vmatpush2.msra.mxu0 0.0
  %1224 = vmatprep.subr.mxu0 0.0
  %1225 = vmatpush2.msra.mxu0 0.0
  %1226 = vmatprep.subr.mxu0 0.0
  %1227 = vmatpush2.msra.mxu0 0.0
  %1228 = vmatprep.subr.mxu0 0.0
  %1229 = vmatpush2.msra.mxu0 0.0
  %1230 = vmatprep.subr.mxu0 0.0
  %1231 = vmatpush2.msra.mxu0 0.0
  %1232 = vmatprep.subr.mxu0 0.0
  %1233 = vmatpush2.msra.mxu0 0.0
  %1234 = vmatprep.subr.mxu0 0.0
  %1235 = vmatpush2.msra.mxu0 0.0
  %1236 = vmatprep.subr.mxu0 0.0
  %1237 = vmatpush2.msra.mxu0 0.0
  %1238 = vmatprep.mubr.f32.mxu0 0.0
  %1239 = vmatmul.mubr.f32.gmra.mxu0 %v1102
  %v1240 = vpop.f32.mrf.mxu0
  %v1241 = vadd.f32 0.0, %v1240
  %v1242 = vpop.f32.mrf.mxu0
  %v1243 = vadd.f32 0.0, %v1242
  %1244 = vdwg.mxu0
  %v1245 = vadd.f32 %v229, %v1170
  %v1246 = vadd.f32 %v230, %v1172
  %v1247 = vadd.f32 %v231, %v1241
  %v1248 = vadd.f32 %v232, %v1243
  %v1249 = vxor.u32 %v1245, 2147483648
  %v1250 = vmul.f32 %v1249, 1.442695
  %v1251 = vpow.pop %v1250
  %v1252 = vadd.f32 %v1251, 1.0
  %v1253 = vrcp.pop %v1252
  %v1254 = vmul.f32 1.0, %v1253
  %v1255 = vxor.u32 %v1246, 2147483648
  %v1256 = vmul.f32 %v1255, 1.442695
  %v1257 = vpow.pop %v1256
  %v1258 = vadd.f32 %v1257, 1.0
  %v1259 = vrcp.pop %v1258
  %v1260 = vmul.f32 1.0, %v1259
  %v1261 = vtanh.pop %v1247
  %v1262 = vxor.u32 %v1248, 2147483648
  %v1263 = vmul.f32 %v1262, 1.442695
  %v1264 = vpow.pop %v1263
  %v1265 = vadd.f32 %v1264, 1.0
  %v1266 = vrcp.pop %v1265
  %v1267 = vmul.f32 1.0, %v1266
  %v1268 = vmul.f32 %v1260, %v1100
  %v1269 = vmul.f32 %v1254, %v1261
  %v1270 = vadd.f32 %v1268, %v1269
  %v1271 = vtanh.pop %v1270
  %v1272 = vmul.f32 %v1267, %v1271
  %1273 = vmatprep.subr.mxu0 %v81
  %1274 = vmatpush1.msra.mxu0 %v80
  %1275 = vmatprep.subr.mxu0 %v77
  %1276 = vmatpush1.msra.mxu0 %v76
  %1277 = vmatprep.subr.mxu0 %v73
  %1278 = vmatpush1.msra.mxu0 %v72
  %1279 = vmatprep.subr.mxu0 %v69
  %1280 = vmatpush1.msra.mxu0 %v68
  %1281 = vmatprep.subr.mxu0 %v65
  %1282 = vmatpush1.msra.mxu0 %v64
  %1283 = vmatprep.subr.mxu0 %v61
  %1284 = vmatpush1.msra.mxu0 %v60
  %1285 = vmatprep.subr.mxu0 %v57
  %1286 = vmatpush1.msra.mxu0 %v56
  %1287 = vmatprep.subr.mxu0 %v53
  %1288 = vmatpush1.msra.mxu0 %v52
  %1289 = vmatprep.subr.mxu0 %v49
  %1290 = vmatpush1.msra.mxu0 %v48
  %1291 = vmatprep.subr.mxu0 %v45
  %1292 = vmatpush1.msra.mxu0 %v44
  %1293 = vmatprep.subr.mxu0 %v41
  %1294 = vmatpush1.msra.mxu0 %v40
  %1295 = vmatprep.subr.mxu0 %v37
  %1296 = vmatpush1.msra.mxu0 %v36
  %1297 = vmatprep.subr.mxu0 %v33
  %1298 = vmatpush1.msra.mxu0 %v32
  %1299 = vmatprep.subr.mxu0 %v29
  %1300 = vmatpush1.msra.mxu0 %v28
  %1301 = vmatprep.subr.mxu0 %v25
  %1302 = vmatpush1.msra.mxu0 %v24
  %1303 = vmatprep.subr.mxu0 %v21
  %1304 = vmatpush1.msra.mxu0 %v20
  %1305 = vmatprep.subr.mxu0 0.0
  %1306 = vmatpush2.msra.mxu0 0.0
  %1307 = vmatprep.subr.mxu0 0.0
  %1308 = vmatpush2.msra.mxu0 0.0
  %1309 = vmatprep.subr.mxu0 0.0
  %1310 = vmatpush2.msra.mxu0 0.0
  %1311 = vmatprep.subr.mxu0 0.0
  %1312 = vmatpush2.msra.mxu0 0.0
  %1313 = vmatprep.subr.mxu0 0.0
  %1314 = vmatpush2.msra.mxu0 0.0
  %1315 = vmatprep.subr.mxu0 0.0
  %1316 = vmatpush2.msra.mxu0 0.0
  %1317 = vmatprep.subr.mxu0 0.0
  %1318 = vmatpush2.msra.mxu0 0.0
  %1319 = vmatprep.subr.mxu0 0.0
  %1320 = vmatpush2.msra.mxu0 0.0
  %1321 = vmatprep.subr.mxu0 0.0
  %1322 = vmatpush2.msra.mxu0 0.0
  %1323 = vmatprep.subr.mxu0 0.0
  %1324 = vmatpush2.msra.mxu0 0.0
  %1325 = vmatprep.subr.mxu0 0.0
  %1326 = vmatpush2.msra.mxu0 0.0
  %1327 = vmatprep.subr.mxu0 0.0
  %1328 = vmatpush2.msra.mxu0 0.0
  %1329 = vmatprep.subr.mxu0 0.0
  %1330 = vmatpush2.msra.mxu0 0.0
  %1331 = vmatprep.subr.mxu0 0.0
  %1332 = vmatpush2.msra.mxu0 0.0
  %1333 = vmatprep.subr.mxu0 0.0
  %1334 = vmatpush2.msra.mxu0 0.0
  %1335 = vmatprep.subr.mxu0 0.0
  %1336 = vmatpush2.msra.mxu0 0.0
  %1337 = vmatprep.mubr.f32.mxu0 0.0
  %1338 = vmatmul.mubr.f32.gmra.mxu0 %v1272
  %v1339 = vpop.f32.mrf.mxu0
  %v1340 = vadd.f32 0.0, %v1339
  %v1341 = vpop.f32.mrf.mxu0
  %v1342 = vadd.f32 0.0, %v1341
  %1343 = vdwg.mxu0
  %1344 = vmatprep.subr.mxu0 %v83
  %1345 = vmatpush1.msra.mxu0 %v82
  %1346 = vmatprep.subr.mxu0 %v79
  %1347 = vmatpush1.msra.mxu0 %v78
  %1348 = vmatprep.subr.mxu0 %v75
  %1349 = vmatpush1.msra.mxu0 %v74
  %1350 = vmatprep.subr.mxu0 %v71
  %1351 = vmatpush1.msra.mxu0 %v70
  %1352 = vmatprep.subr.mxu0 %v67
  %1353 = vmatpush1.msra.mxu0 %v66
  %1354 = vmatprep.subr.mxu0 %v63
  %1355 = vmatpush1.msra.mxu0 %v62
  %1356 = vmatprep.subr.mxu0 %v59
  %1357 = vmatpush1.msra.mxu0 %v58
  %1358 = vmatprep.subr.mxu0 %v55
  %1359 = vmatpush1.msra.mxu0 %v54
  %1360 = vmatprep.subr.mxu0 %v51
  %1361 = vmatpush1.msra.mxu0 %v50
  %1362 = vmatprep.subr.mxu0 %v47
  %1363 = vmatpush1.msra.mxu0 %v46
  %1364 = vmatprep.subr.mxu0 %v43
  %1365 = vmatpush1.msra.mxu0 %v42
  %1366 = vmatprep.subr.mxu0 %v39
  %1367 = vmatpush1.msra.mxu0 %v38
  %1368 = vmatprep.subr.mxu0 %v35
  %1369 = vmatpush1.msra.mxu0 %v34
  %1370 = vmatprep.subr.mxu0 %v31
  %1371 = vmatpush1.msra.mxu0 %v30
  %1372 = vmatprep.subr.mxu0 %v27
  %1373 = vmatpush1.msra.mxu0 %v26
  %1374 = vmatprep.subr.mxu0 %v23
  %1375 = vmatpush1.msra.mxu0 %v22
  %1376 = vmatprep.subr.mxu0 0.0
  %1377 = vmatpush2.msra.mxu0 0.0
  %1378 = vmatprep.subr.mxu0 0.0
  %1379 = vmatpush2.msra.mxu0 0.0
  %1380 = vmatprep.subr.mxu0 0.0
  %1381 = vmatpush2.msra.mxu0 0.0
  %1382 = vmatprep.subr.mxu0 0.0
  %1383 = vmatpush2.msra.mxu0 0.0
  %1384 = vmatprep.subr.mxu0 0.0
  %1385 = vmatpush2.msra.mxu0 0.0
  %1386 = vmatprep.subr.mxu0 0.0
  %1387 = vmatpush2.msra.mxu0 0.0
  %1388 = vmatprep.subr.mxu0 0.0
  %1389 = vmatpush2.msra.mxu0 0.0
  %1390 = vmatprep.subr.mxu0 0.0
  %1391 = vmatpush2.msra.mxu0 0.0
  %1392 = vmatprep.subr.mxu0 0.0
  %1393 = vmatpush2.msra.mxu0 0.0
  %1394 = vmatprep.subr.mxu0 0.0
  %1395 = vmatpush2.msra.mxu0 0.0
  %1396 = vmatprep.subr.mxu0 0.0
  %1397 = vmatpush2.msra.mxu0 0.0
  %1398 = vmatprep.subr.mxu0 0.0
  %1399 = vmatpush2.msra.mxu0 0.0
  %1400 = vmatprep.subr.mxu0 0.0
  %1401 = vmatpush2.msra.mxu0 0.0
  %1402 = vmatprep.subr.mxu0 0.0
  %1403 = vmatpush2.msra.mxu0 0.0
  %1404 = vmatprep.subr.mxu0 0.0
  %1405 = vmatpush2.msra.mxu0 0.0
  %1406 = vmatprep.subr.mxu0 0.0
  %1407 = vmatpush2.msra.mxu0 0.0
  %1408 = vmatprep.mubr.f32.mxu0 0.0
  %1409 = vmatmul.mubr.f32.gmra.mxu0 %v1272
  %v1410 = vpop.f32.mrf.mxu0
  %v1411 = vadd.f32 0.0, %v1410
  %v1412 = vpop.f32.mrf.mxu0
  %v1413 = vadd.f32 0.0, %v1412
  %1414 = vdwg.mxu0
  %v1415 = vadd.f32 %v233, %v1340
  %v1416 = vadd.f32 %v234, %v1342
  %v1417 = vadd.f32 %v235, %v1411
  %v1418 = vadd.f32 %v236, %v1413
  %v1419 = vxor.u32 %v1415, 2147483648
  %v1420 = vmul.f32 %v1419, 1.442695
  %v1421 = vpow.pop %v1420
  %v1422 = vadd.f32 %v1421, 1.0
  %v1423 = vrcp.pop %v1422
  %v1424 = vmul.f32 1.0, %v1423
  %v1425 = vxor.u32 %v1416, 2147483648
  %v1426 = vmul.f32 %v1425, 1.442695
  %v1427 = vpow.pop %v1426
  %v1428 = vadd.f32 %v1427, 1.0
  %v1429 = vrcp.pop %v1428
  %v1430 = vmul.f32 1.0, %v1429
  %v1431 = vtanh.pop %v1417
  %v1432 = vxor.u32 %v1418, 2147483648
  %v1433 = vmul.f32 %v1432, 1.442695
  %v1434 = vpow.pop %v1433
  %v1435 = vadd.f32 %v1434, 1.0
  %v1436 = vrcp.pop %v1435
  %v1437 = vmul.f32 1.0, %v1436
  %v1438 = vmul.f32 %v1430, %v1270
  %v1439 = vmul.f32 %v1424, %v1431
  %v1440 = vadd.f32 %v1438, %v1439
  %v1441 = vtanh.pop %v1440
  %v1442 = vmul.f32 %v1437, %v1441
  %1443 = vst [vmem:[%s4] sm:$0x3] %v1442
  %1444 = vst [vmem:[%s5] sm:$0x3] %v1440
  // Predicated region
  $region18: #{encoder_forward.1} parent=0 // pred_check
    _
  $region19: #{encoder_forward.1} parent=0 // pred_check_branch
    %1446 = sbr.rel (0) target = $region21
  $region20: #{encoder_forward.1} parent=0 // pred_region
    _
  $region21: #{encoder_forward.1} parent=0 // pred_fallthru
    _
  // Predicated region
  $region22: #{encoder_forward.1} parent=0 // pred_check
    _
  $region23: #{encoder_forward.1} parent=0 // pred_check_branch
    %1448 = sbr.rel (0) target = $region25
  $region24: #{encoder_forward.1} parent=0 // pred_region
    _
  $region25: #{encoder_forward.1} parent=0 // pred_fallthru
    _
  // Predicated region
  $region26: #{encoder_forward.1} parent=0 // pred_check
    _
  $region27: #{encoder_forward.1} parent=0 // pred_check_branch
    %1450 = sbr.rel (0) target = $region29
  $region28: #{encoder_forward.1} parent=0 // pred_region
    _
  $region29: #{encoder_forward.1} parent=0 // pred_fallthru
    _
  // Predicated region
  $region30: #{encoder_forward.1} parent=0 // pred_check
    _
  $region31: #{encoder_forward.1} parent=0 // pred_check_branch
    %1452 = sbr.rel (0) target = $region33
  $region32: #{encoder_forward.1} parent=0 // pred_region
    _
  $region33: #{encoder_forward.1} parent=0 // pred_fallthru
    _

</llo_original>
